<compile_context>
chip_gen: v5e
topology: v5e:2x2
jax: 0.10.0
libtpu: 0.0.40
codegen_flags: <defaults>
</compile_context>

<pallas_src>
import functools

import jax
import jax.numpy as jnp
from jax.experimental import pallas as pl
from jax.experimental.pallas import tpu as pltpu


def _round_up(x, m):
    return (x + m - 1) // m * m


def _vmem_limit_bytes():
    try:
        cap = int(pltpu.get_tpu_info().vmem_capacity_bytes)
    except Exception:
        cap = 128 * 1024 * 1024
    # 96 MiB on 128-MiB chips (v5e/v6e), 48 MiB on v7x (64 MiB per TC).
    return int(min(96 * 1024 * 1024, cap * 3 // 4))


_VMEM_LIMIT = _vmem_limit_bytes()


# ----------------------------- Pallas kernels -----------------------------

def _mm_bn_kernel(a_ref, b_ref, s_ref, c_ref, *rest, relu, residual):
    """Whole-K matmul + fused BN(scale,bias) + optional residual add + ReLU."""
    if residual:
        r_ref, o_ref = rest
    else:
        (o_ref,) = rest
    y = jnp.dot(a_ref[...], b_ref[...], preferred_element_type=jnp.float32)
    y = y * s_ref[...] + c_ref[...]
    if residual:
        y = y + r_ref[...].astype(jnp.float32)
    if relu:
        y = jnp.maximum(y, 0.0)
    o_ref[...] = y.astype(o_ref.dtype)


def _conv3x3_kernel(*refs, taps, nplanes, ho, wo, wo_pad, relu):
    """3x3 conv for one image: 9 tap matmuls accumulated in f32 VMEM scratch,
    fused BN + ReLU.  Taps are (plane, row_off, col_off) contiguous slices."""
    planes = refs[:nplanes]
    w_ref, s_ref, b_ref, o_ref, acc_ref = refs[nplanes:]
    cin = planes[0].shape[-1]
    cout = o_ref.shape[-1]
    for t, (p, di, dj) in enumerate(taps):
        a = planes[p][0, di:di + ho, dj:dj + wo_pad, :]
        a = a.reshape(ho * wo_pad, cin)          # wo_pad % 8 == 0 -> trivial collapse
        contrib = jnp.dot(a, w_ref[t], preferred_element_type=jnp.float32)
        if t == 0:
            acc_ref[...] = contrib
        else:
            acc_ref[...] += contrib
    y = acc_ref[...] * s_ref[...] + b_ref[...]
    if relu:
        y = jnp.maximum(y, 0.0)
    y = y.reshape(ho, wo_pad, cout)[:, :wo, :]
    o_ref[0] = y.astype(o_ref.dtype)


def _maxpool_kernel(*refs, taps, ho, wo):
    """3x3 / stride-2 / pad-1 max pool for one image from 4 stride-phase planes."""
    planes = refs[:4]
    o_ref = refs[4]
    m = None
    for (p, di, dj) in taps:
        v = planes[p][0, di:di + ho, dj:dj + wo, :]
        m = v if m is None else jnp.maximum(m, v)
    o_ref[0] = m


def _mean_kernel(x_ref, o_ref):
    """(N, HW, Cblk) -> mean over spatial axis (f32)."""
    o_ref[...] = jnp.mean(x_ref[...].astype(jnp.float32), axis=1)


# ----------------------------- matmul wrapper -----------------------------

def _pick_tn(n, m_tiles):
    if n <= 128:
        return n
    need_two = m_tiles == 1          # keep >=2 parallel tiles for v7x dual TC
    for t in (512, 256, 128):
        if n % t == 0 and (not need_two or n // t >= 2):
            return t
    return n


def _matmul_bn_act(a, b, scale, bias, relu, residual=None,
                   out_dtype=jnp.bfloat16):
    """(M,K)@(K,N) with bf16 operands on the MXU, f32 accumulation, fused
    per-column BN(scale,bias), optional residual add, optional ReLU.
    Whole-K (no k-grid) for every ResNet-50 matmul."""
    M, K = a.shape
    _, N = b.shape
    a = a.astype(jnp.bfloat16)
    b = b.astype(jnp.bfloat16)
    scale = scale.reshape(1, N).astype(jnp.float32)
    bias = bias.reshape(1, N).astype(jnp.float32)

    # Lane-dense K (only the 7x7 stem has K=147 -> 256); K<=128 stays as-is.
    Kp = K
    if K > 128 and K % 128 != 0:
        Kp = _round_up(K, 128)
        a = jnp.pad(a, ((0, 0), (0, Kp - K)))
        b = jnp.pad(b, ((0, Kp - K), (0, 0)))

    tm = min(512, _round_up(M, 16))
    m_tiles = _round_up(M, tm) // tm
    tn = _pick_tn(N, m_tiles)
    if m_tiles == 1 and N // tn == 1 and M >= 32:
        # (1,1) grid would idle one v7x TensorCore -> split M instead.
        tm = _round_up((M + 1) // 2, 16)
        m_tiles = _round_up(M, tm) // tm
    Mp = _round_up(M, tm)
    if Mp != M:
        a = jnp.pad(a, ((0, Mp - M), (0, 0)))
        if residual is not None:
            residual = jnp.pad(residual, ((0, Mp - M), (0, 0)))

    has_res = residual is not None
    res_args = (residual.astype(jnp.bfloat16),) if has_res else ()

    in_specs = [
        pl.BlockSpec((tm, Kp), lambda i, j: (i, 0)),
        pl.BlockSpec((Kp, tn), lambda i, j: (0, j)),
        pl.BlockSpec((1, tn), lambda i, j: (0, j)),
        pl.BlockSpec((1, tn), lambda i, j: (0, j)),
    ]
    if has_res:
        in_specs.append(pl.BlockSpec((tm, tn), lambda i, j: (i, j)))

    out = pl.pallas_call(
        functools.partial(_mm_bn_kernel, relu=relu, residual=has_res),
        out_shape=jax.ShapeDtypeStruct((Mp, N), out_dtype),
        grid_spec=pltpu.PrefetchScalarGridSpec(
            num_scalar_prefetch=0,
            grid=(Mp // tm, N // tn),
            in_specs=in_specs,
            out_specs=pl.BlockSpec((tm, tn), lambda i, j: (i, j)),
        ),
        compiler_params=pltpu.CompilerParams(
            dimension_semantics=("parallel", "parallel"),
            vmem_limit_bytes=_VMEM_LIMIT),
    )(a, b, scale, bias, *res_args)

    if Mp != M:
        out = out[:M]
    return out


# ----------------------------- 3x3 conv / pool helpers -----------------------------

def _shift_planes(x, stride, ho, w_need, pad_value=0.0):
    """Pad x for a 3x3 / pad-1 window and return (planes, taps) such that tap
    (di,dj) of the window is planes[p][:, r:r+ho, c:c+w_need, :] with
    (p, r, c) = taps[di*3+dj] -- all contiguous slices (stride folded into the
    phase split), so no strided reads are needed inside the kernel."""
    n, h, wd, c = x.shape
    if stride == 1:
        hp_need, wp_need = ho + 2, w_need + 2
    else:
        hp_need, wp_need = 2 * ho + 1, 2 * w_need + 1
    xp = jnp.pad(x, ((0, 0),
                     (1, max(1, hp_need - h - 1)),
                     (1, max(1, wp_need - wd - 1)),
                     (0, 0)), constant_values=pad_value)
    if stride == 1:
        planes = [xp]
        taps = [(0, di, dj) for di in range(3) for dj in range(3)]
    else:
        planes = [xp[:, pi::2, pj::2, :] for pi in range(2) for pj in range(2)]
        taps = [(2 * (di % 2) + (dj % 2), di // 2, dj // 2)
                for di in range(3) for dj in range(3)]
    return planes, taps


def _conv3x3_bn(x, w, scale, bias, *, stride, relu):
    """3x3 conv (pad=1) + BN + optional ReLU, one image per grid step."""
    n, h, wd, cin = x.shape
    cout = w.shape[0]
    ho = (h + 2 - 3) // stride + 1
    wo = (wd + 2 - 3) // stride + 1
    wo_pad = _round_up(wo, 8)
    planes, taps = _shift_planes(x, stride, ho, wo_pad, pad_value=0.0)

    wmat = jnp.transpose(w, (2, 3, 1, 0)).reshape(9, cin, cout).astype(jnp.bfloat16)
    scale = scale.reshape(1, cout).astype(jnp.float32)
    bias = bias.reshape(1, cout).astype(jnp.float32)

    in_specs = [pl.BlockSpec((1,) + tuple(p.shape[1:]), lambda b: (b, 0, 0, 0))
                for p in planes]
    in_specs += [
        pl.BlockSpec((9, cin, cout), lambda b: (0, 0, 0)),
        pl.BlockSpec((1, cout), lambda b: (0, 0)),
        pl.BlockSpec((1, cout), lambda b: (0, 0)),
    ]
    kernel = functools.partial(_conv3x3_kernel, taps=tuple(taps),
                               nplanes=len(planes), ho=ho, wo=wo,
                               wo_pad=wo_pad, relu=relu)
    return pl.pallas_call(
        kernel,
        out_shape=jax.ShapeDtypeStruct((n, ho, wo, cout), jnp.bfloat16),
        grid_spec=pltpu.PrefetchScalarGridSpec(
            num_scalar_prefetch=0,
            grid=(n,),
            in_specs=in_specs,
            out_specs=pl.BlockSpec((1, ho, wo, cout), lambda b: (b, 0, 0, 0)),
            scratch_shapes=[pltpu.VMEM((ho * wo_pad, cout), jnp.float32)],
        ),
        compiler_params=pltpu.CompilerParams(
            dimension_semantics=("parallel",),
            vmem_limit_bytes=_VMEM_LIMIT),
    )(*planes, wmat, scale, bias)


# ----------------------------- op wrappers -----------------------------

@functools.partial(jax.jit, static_argnames=("stride", "pad", "relu"))
def conv_bn(x, w, scale, bias, *, stride, pad, relu, residual=None):
    """x: NHWC (bf16), w: (Cout, Cin, kh, kw). Conv + fused BN(+residual)(+ReLU)."""
    n, h, wd, cin = x.shape
    cout, _, kh, kw = w.shape
    ho = (h + 2 * pad - kh) // stride + 1
    wo = (wd + 2 * pad - kw) // stride + 1

    if kh == 1 and kw == 1 and pad == 0:
        # 1x1 conv: pure matmul.  (Stride-2 occurs only on the 3 downsample
        # convs; the XLA subsample slice there is small and kept.)
        xs = x[:, ::stride, ::stride, :] if stride > 1 else x
        a = xs.reshape(n * ho * wo, cin)
        wmat = w.reshape(cout, cin).T
        res2d = None if residual is None else residual.reshape(n * ho * wo, cout)
        y = _matmul_bn_act(a, wmat, scale, bias, relu, res2d)
        return y.reshape(n, ho, wo, cout)

    if kh == 3 and kw == 3 and pad == 1 and residual is None:
        # 3x3 conv: tap-accumulating Pallas kernel, no im2col materialization.
        return _conv3x3_bn(x, w, scale, bias, stride=stride, relu=relu)

    # Generic path (only the 7x7 stem): XLA im2col into the whole-K matmul.
    xp = jnp.pad(x, ((0, 0), (pad, pad), (pad, pad), (0, 0)))
    cols = [xp[:, i:i + ho * stride:stride, j:j + wo * stride:stride, :]
            for i in range(kh) for j in range(kw)]
    patches = jnp.stack(cols, axis=3).reshape(n * ho * wo, kh * kw * cin)
    wmat = jnp.transpose(w, (2, 3, 1, 0)).reshape(kh * kw * cin, cout)
    res2d = None if residual is None else residual.reshape(n * ho * wo, cout)
    y = _matmul_bn_act(patches, wmat, scale, bias, relu, res2d)
    return y.reshape(n, ho, wo, cout)


@jax.jit
def maxpool_3x3_s2(x):
    """3x3 max pool, stride 2, padding 1 (NHWC): single fused Pallas kernel."""
    n, h, wd, c = x.shape
    ho = (h - 1) // 2 + 1
    wo = (wd - 1) // 2 + 1
    planes, taps = _shift_planes(x, 2, ho, wo, pad_value=-float("inf"))
    in_specs = [pl.BlockSpec((1,) + tuple(p.shape[1:]), lambda b: (b, 0, 0, 0))
                for p in planes]
    return pl.pallas_call(
        functools.partial(_maxpool_kernel, taps=tuple(taps), ho=ho, wo=wo),
        out_shape=jax.ShapeDtypeStruct((n, ho, wo, c), x.dtype),
        grid_spec=pltpu.PrefetchScalarGridSpec(
            num_scalar_prefetch=0,
            grid=(n,),
            in_specs=in_specs,
            out_specs=pl.BlockSpec((1, ho, wo, c), lambda b: (b, 0, 0, 0)),
        ),
        compiler_params=pltpu.CompilerParams(
            dimension_semantics=("parallel",),
            vmem_limit_bytes=_VMEM_LIMIT),
    )(*planes)


@jax.jit
def global_avgpool(x):
    """AdaptiveAvgPool2d((1,1)) + flatten: (N,H,W,C) -> (N,C) in f32."""
    n, h, w, c = x.shape
    xr = x.reshape(n, h * w, c)
    tc = 256 if c % 256 == 0 else (128 if c % 128 == 0 else c)
    return pl.pallas_call(
        _mean_kernel,
        out_shape=jax.ShapeDtypeStruct((n, c), jnp.float32),
        grid_spec=pltpu.PrefetchScalarGridSpec(
            num_scalar_prefetch=0,
            grid=(c // tc,),
            in_specs=[pl.BlockSpec((n, h * w, tc), lambda j: (0, 0, j))],
            out_specs=pl.BlockSpec((n, tc), lambda j: (0, j)),
        ),
        compiler_params=pltpu.CompilerParams(
            dimension_semantics=("parallel",),
            vmem_limit_bytes=_VMEM_LIMIT),
    )(xr)


# ----------------------------- parameters -----------------------------

def _init_conv(key, cout, cin, kh, kw):
    std = (2.0 / (cin * kh * kw)) ** 0.5
    return jax.random.normal(key, (cout, cin, kh, kw), jnp.float32) * std


def _init_bn(key, c):
    k1, k2, k3, k4 = jax.random.split(key, 4)
    gamma = 1.0 + 0.1 * jax.random.normal(k1, (c,), jnp.float32)
    beta = 0.1 * jax.random.normal(k2, (c,), jnp.float32)
    mean = 0.1 * jax.random.normal(k3, (c,), jnp.float32)
    var = 1.0 + 0.5 * jax.random.uniform(k4, (c,), jnp.float32)
    eps = 1e-5
    scale = gamma / jnp.sqrt(var + eps)
    bias = beta - mean * scale
    return scale, bias


def _make_layer(key, in_planes, planes, blocks, stride):
    layer = []
    for b in range(blocks):
        key, *ks = jax.random.split(key, 9)
        s = stride if b == 0 else 1
        p = {}
        p["conv1_w"] = _init_conv(ks[0], planes, in_planes, 1, 1)
        p["bn1_s"], p["bn1_b"] = _init_bn(ks[1], planes)
        p["conv2_w"] = _init_conv(ks[2], planes, planes, 3, 3)
        p["bn2_s"], p["bn2_b"] = _init_bn(ks[3], planes)
        p["conv3_w"] = _init_conv(ks[4], planes * 4, planes, 1, 1)
        p["bn3_s"], p["bn3_b"] = _init_bn(ks[5], planes * 4)
        if s != 1 or in_planes != planes * 4:
            p["down_w"] = _init_conv(ks[6], planes * 4, in_planes, 1, 1)
            p["down_s"], p["down_b"] = _init_bn(ks[7], planes * 4)
        p["stride"] = s
        layer.append(p)
        in_planes = planes * 4
    return layer, in_planes, key


def init_ft_net_params(key):
    params = {}
    key, k1, k2 = jax.random.split(key, 3)
    params["conv1_w"] = _init_conv(k1, 64, 3, 7, 7)
    params["bn1_s"], params["bn1_b"] = _init_bn(k2, 64)
    in_planes = 64
    for name, planes, blocks, stride in (
            ("layer1", 64, 3, 1), ("layer2", 128, 4, 2),
            ("layer3", 256, 6, 2), ("layer4", 512, 3, 2)):
        params[name], in_planes, key = _make_layer(key, in_planes, planes,
                                                   blocks, stride)
    return params


# ----------------------------- forward -----------------------------

def _bottleneck(x, p):
    if "down_w" in p:
        identity = conv_bn(x, p["down_w"], p["down_s"], p["down_b"],
                           stride=p["stride"], pad=0, relu=False)
    else:
        identity = x
    out = conv_bn(x, p["conv1_w"], p["bn1_s"], p["bn1_b"],
                  stride=1, pad=0, relu=True)
    out = conv_bn(out, p["conv2_w"], p["bn2_s"], p["bn2_b"],
                  stride=p["stride"], pad=1, relu=True)
    # residual add + final ReLU fused into the conv3 matmul epilogue
    out = conv_bn(out, p["conv3_w"], p["bn3_s"], p["bn3_b"],
                  stride=1, pad=0, relu=True, residual=identity)
    return out


def ft_net_forward(params, x_nchw):
    """Equivalent of ft_net.forward. Input NCHW (PyTorch); output (N, 2048)."""
    x = jnp.transpose(x_nchw, (0, 2, 3, 1)).astype(jnp.bfloat16)  # NCHW -> NHWC
    x = conv_bn(x, params["conv1_w"], params["bn1_s"], params["bn1_b"],
                stride=2, pad=3, relu=True)       # conv1 + bn1 + relu
    x = maxpool_3x3_s2(x)                         # maxpool
    for name in ("layer1", "layer2", "layer3", "layer4"):
        for p in params[name]:
            x = _bottleneck(x, p)
    return global_avgpool(x)                      # avgpool + x.view(N, -1)


# ----------------------------- main -----------------------------

if __name__ == "__main__":
    key = jax.random.PRNGKey(0)
    key, pkey, xkey = jax.random.split(key, 3)

    params = init_ft_net_params(pkey)

    # Small but semantics-consistent input: ResNet-50 needs 3 input channels;
    # 64x64 spatial keeps every stage (incl. final 2x2 avgpool) non-degenerate.
    x = jax.random.normal(xkey, (2, 3, 64, 64), jnp.float32)

    feats = ft_net_forward(params, x)
    feats = jax.block_until_ready(feats)

    assert feats.shape == (2, 2048), feats.shape
    assert bool(jnp.all(jnp.isfinite(feats)))
    print("KERNEL_OK")
</pallas_src>

<mosaic_0001>
module attributes {stable_mosaic.version = 11 : i64} {
  func.func @_mm_bn_kernel(%arg0: i32, %arg1: i32, %arg2: memref<512x256xbf16, #tpu.memory_space<vmem>>, %arg3: memref<256x64xbf16, #tpu.memory_space<vmem>>, %arg4: memref<1x64xf32, #tpu.memory_space<vmem>>, %arg5: memref<1x64xf32, #tpu.memory_space<vmem>>, %arg6: memref<512x64xbf16, #tpu.memory_space<vmem>>) attributes {dimension_semantics = [#tpu.dimension_semantics<parallel>, #tpu.dimension_semantics<parallel>], iteration_bounds = array<i64: 4, 1>, scalar_prefetch = 0 : i64, scratch_operands = 0 : i64, tpu.core_type = #tpu.core_type<tc>, window_params = [{transform_indices = @transform_0, window_bounds = array<i64: 512, 256>}, {transform_indices = @transform_1, window_bounds = array<i64: 256, 64>}, {transform_indices = @transform_2, window_bounds = array<i64: 1, 64>}, {transform_indices = @transform_3, window_bounds = array<i64: 1, 64>}, {transform_indices = @transform_4, window_bounds = array<i64: 512, 64>}]} {
    %c0 = arith.constant 0 : index
    %c0_0 = arith.constant 0 : index
    %0 = vector.load %arg2[%c0, %c0_0] : memref<512x256xbf16, #tpu.memory_space<vmem>>, vector<512x256xbf16>
    %c0_1 = arith.constant 0 : index
    %c0_2 = arith.constant 0 : index
    %1 = vector.load %arg3[%c0_1, %c0_2] : memref<256x64xbf16, #tpu.memory_space<vmem>>, vector<256x64xbf16>
    %cst = arith.constant dense<0.000000e+00> : vector<512x64xf32>
    %2 = tpu.matmul %0, %1, %cst {dimension_numbers = #tpu.dot_dimension_numbers<[1], [0], [0], [1], [0, 0, 1, 1], [], []>} : vector<512x256xbf16>, vector<256x64xbf16>, vector<512x64xf32> -> vector<512x64xf32>
    %c0_3 = arith.constant 0 : index
    %c0_4 = arith.constant 0 : index
    %3 = vector.load %arg4[%c0_3, %c0_4] : memref<1x64xf32, #tpu.memory_space<vmem>>, vector<1x64xf32>
    %4 = vector.broadcast %3 : vector<1x64xf32> to vector<512x64xf32>
    %5 = arith.mulf %2, %4 : vector<512x64xf32>
    %c0_5 = arith.constant 0 : index
    %c0_6 = arith.constant 0 : index
    %6 = vector.load %arg5[%c0_5, %c0_6] : memref<1x64xf32, #tpu.memory_space<vmem>>, vector<1x64xf32>
    %7 = vector.broadcast %6 : vector<1x64xf32> to vector<512x64xf32>
    %8 = arith.addf %5, %7 : vector<512x64xf32>
    %cst_7 = arith.constant 0.000000e+00 : f32
    %9 = vector.broadcast %cst_7 : f32 to vector<512x64xf32>
    %10 = arith.maximumf %8, %9 : vector<512x64xf32>
    %11 = arith.truncf %10 : vector<512x64xf32> to vector<512x64xbf16>
    %c0_8 = arith.constant 0 : index
    %c0_9 = arith.constant 0 : index
    %12 = vector.load %arg6[%c0_8, %c0_9] : memref<512x64xbf16, #tpu.memory_space<vmem>>, vector<512x64xbf16>
    tpu.vector_store %arg6[%c0_8, %c0_9], %11 {strides = array<i32>} : memref<512x64xbf16, #tpu.memory_space<vmem>>, vector<512x64xbf16>,
    return
  }
  func.func @transform_0(%arg0: i32, %arg1: i32) -> (i32, i32) {
    %c0_i32 = arith.constant 0 : i32
    %c0_i32_0 = arith.constant 0 : i32
    return %arg0, %c0_i32 : i32, i32
  }
  func.func @transform_1(%arg0: i32, %arg1: i32) -> (i32, i32) {
    %c0_i32 = arith.constant 0 : i32
    %c0_i32_0 = arith.constant 0 : i32
    return %c0_i32, %arg1 : i32, i32
  }
  func.func @transform_2(%arg0: i32, %arg1: i32) -> (i32, i32) {
    %c0_i32 = arith.constant 0 : i32
    %c0_i32_0 = arith.constant 0 : i32
    return %c0_i32, %arg1 : i32, i32
  }
  func.func @transform_3(%arg0: i32, %arg1: i32) -> (i32, i32) {
    %c0_i32 = arith.constant 0 : i32
    %c0_i32_0 = arith.constant 0 : i32
    return %c0_i32, %arg1 : i32, i32
  }
  func.func @transform_4(%arg0: i32, %arg1: i32) -> (i32, i32) {
    %c0_i32 = arith.constant 0 : i32
    return %arg0, %arg1 : i32, i32
  }
}

</mosaic_0001>

<llo_original>
// kernel: conv_bn.1
$region0: #{conv_bn.1}
  #allocation0 [shape = 'u32[]', space=smem, size = 0x4, offset = 0x4, fixed_abs, tag = 'smem constant byte address 0x4 - core index']
  #allocation1 [shape = 'u32[72,128]{1,0:T(1,128)}', space=vmem, size = 0x9000, scoped, tag = 'internal scratch']
  %s0 = inlined_call_operand.vmem [shape: bf16[2048,256], index: 0, kind: input, shape index: {}]
  %s1 = inlined_call_operand.vmem [shape: bf16[256,64], index: 1, kind: input, shape index: {}]
  %s2 = inlined_call_operand.vmem [shape: f32[1,64], index: 2, kind: input, shape index: {}]
  %s3 = inlined_call_operand.vmem [shape: f32[1,64], index: 3, kind: input, shape index: {}]
  %s4 = inlined_call_operand.hbm [shape: bf16[2048,64], index: 4, kind: output, shape index: {}]
  %s5 = sld [smem:[#allocation0]]
  $region49: #{conv_bn.1} parent=0
    _
  %s7 = ssub.s32 1, %s5
  %s8 = scalar_select 0, %s7, %s5
  $region1: #{conv_bn.1} parent=0
    #allocation2 [shape = 'u8[262144]{0}', space=vmem, size = 0x40000, scoped, tag = 'output window, operand 0']
    #allocation3 [shape = 's32[2]{0}', space=sflag, size = 0x8, scoped, tag = 'scoped memory for conv_bn.1']
    %9 = vsyncpa [#allocation3], 0
    %s10 = scalar_lea.sflag [#allocation3], 1
    %11 = vsyncpa %s10, 0
    loop: start=0, step=1, limit=6
    $region2: #{conv_bn.1} parent=1 // loop_pre_header
      _
    $region3: #{conv_bn.1} parent=1 // loop_header
      %s13 = sphi 0, %s17
      %p14 = scmp.ge.s32.totalorder %s13, 6
      %s20 = sphi 0, %s32
      %s21 = sphi 0, %s28
      %s22 = sphi 0, %s20
      %s23 = sphi 0, %s21
      %s24 = sphi 0, %s22
      %s25 = sphi 0, %s23
      %s35 = sphi 0, %s37
      %s38 = sphi 0, %s35
      %s39 = sphi 0, %s38
      %s55 = sphi 0, %s39
      %s61 = sphi 0, %s63
      %s64 = sphi 0, %s61
      %s65 = sphi 0, %s64
      %s81 = sphi 0, %s65
      %s87 = sphi 0, %s89
      %s90 = sphi 0, %s87
      %s91 = sphi 0, %s90
      %s107 = sphi 0, %s91
      %s113 = sphi 0, %s115
      %s116 = sphi 0, %s113
      %s117 = sphi 0, %s116
      %s133 = sphi 0, %s117
      %s141 = sphi 0, %s143
      %s144 = sphi 0, %s141
      %s145 = sphi 0, %s144
      %s161 = sphi 0, %s145
    $region4: #{conv_bn.1} parent=1 // loop_header_branch
      %16 = sbr.rel (%p14) target = $region8
    $region5: #{conv_bn.1} parent=1 // loop_body
      %s18 = ssub.s32 %s13, 1
      %s19 = ssub.s32 %s13, 2
      %s26 = sadd.s32 1, %s21
      %p27 = scmp.ge.s32.totalorder %s26, 1
      %s28 = scalar_select %p27, 0, %s26
      %s29 = sadd.s32 1, %s20
      %s30 = scalar_select %p27, %s29, %s20
      %p31 = scmp.ge.s32.totalorder %s30, 4
      %s32 = scalar_select %p31, 0, %s30
      %s33 = ssub.s32 %s20, %s32
      %p34 = scmp.eq.s32.totalorder %s33, 0
      %s36 = sadd.s32 %s35, 1
      %s37 = scalar_select %p34, %s35, %s36
      %p40 = pneg %p34
      %p41 = scmp.eq.s32.totalorder %s13, 3
      %p42 = por %p40, %p41
      %p43 = scmp.ne.s32.totalorder %s35, %s38
      %p44 = scmp.eq.s32.totalorder %s13, 0
      %p45 = por %p43, %p44
      %p46 = scmp.ne.s32.totalorder %s35, %s38
      %p47 = scmp.eq.s32.totalorder %s18, 3
      %p48 = por %p46, %p47
      %p49 = scmp.ne.s32.totalorder %s38, %s39
      %p50 = scmp.eq.s32.totalorder %s18, 0
      %p51 = por %p49, %p50
      %p52 = scmp.ne.s32.totalorder %s38, %s39
      %p53 = scmp.eq.s32.totalorder %s19, 3
      %p54 = por %p52, %p53
      %p56 = scmp.ne.s32.totalorder %s39, %s55
      %p57 = scmp.eq.s32.totalorder %s19, 0
      %p58 = por %p56, %p57
      %s59 = ssub.s32 %s21, %s28
      %p60 = scmp.eq.s32.totalorder %s59, 0
      %s62 = sadd.s32 %s61, 1
      %s63 = scalar_select %p60, %s61, %s62
      %p66 = pneg %p60
      %p67 = scmp.eq.s32.totalorder %s13, 3
      %p68 = por %p66, %p67
      %p69 = scmp.ne.s32.totalorder %s61, %s64
      %p70 = scmp.eq.s32.totalorder %s13, 0
      %p71 = por %p69, %p70
      %p72 = scmp.ne.s32.totalorder %s61, %s64
      %p73 = scmp.eq.s32.totalorder %s18, 3
      %p74 = por %p72, %p73
      %p75 = scmp.ne.s32.totalorder %s64, %s65
      %p76 = scmp.eq.s32.totalorder %s18, 0
      %p77 = por %p75, %p76
      %p78 = scmp.ne.s32.totalorder %s64, %s65
      %p79 = scmp.eq.s32.totalorder %s19, 3
      %p80 = por %p78, %p79
      %p82 = scmp.ne.s32.totalorder %s65, %s81
      %p83 = scmp.eq.s32.totalorder %s19, 0
      %p84 = por %p82, %p83
      %s85 = ssub.s32 %s21, %s28
      %p86 = scmp.eq.s32.totalorder %s85, 0
      %s88 = sadd.s32 %s87, 1
      %s89 = scalar_select %p86, %s87, %s88
      %p92 = pneg %p86
      %p93 = scmp.eq.s32.totalorder %s13, 3
      %p94 = por %p92, %p93
      %p95 = scmp.ne.s32.totalorder %s87, %s90
      %p96 = scmp.eq.s32.totalorder %s13, 0
      %p97 = por %p95, %p96
      %p98 = scmp.ne.s32.totalorder %s87, %s90
      %p99 = scmp.eq.s32.totalorder %s18, 3
      %p100 = por %p98, %p99
      %p101 = scmp.ne.s32.totalorder %s90, %s91
      %p102 = scmp.eq.s32.totalorder %s18, 0
      %p103 = por %p101, %p102
      %p104 = scmp.ne.s32.totalorder %s90, %s91
      %p105 = scmp.eq.s32.totalorder %s19, 3
      %p106 = por %p104, %p105
      %p108 = scmp.ne.s32.totalorder %s91, %s107
      %p109 = scmp.eq.s32.totalorder %s19, 0
      %p110 = por %p108, %p109
      %s111 = ssub.s32 %s21, %s28
      %p112 = scmp.eq.s32.totalorder %s111, 0
      %s114 = sadd.s32 %s113, 1
      %s115 = scalar_select %p112, %s113, %s114
      %p118 = pneg %p112
      %p119 = scmp.eq.s32.totalorder %s13, 3
      %p120 = por %p118, %p119
      %p121 = scmp.ne.s32.totalorder %s113, %s116
      %p122 = scmp.eq.s32.totalorder %s13, 0
      %p123 = por %p121, %p122
      %p124 = scmp.ne.s32.totalorder %s113, %s116
      %p125 = scmp.eq.s32.totalorder %s18, 3
      %p126 = por %p124, %p125
      %p127 = scmp.ne.s32.totalorder %s116, %s117
      %p128 = scmp.eq.s32.totalorder %s18, 0
      %p129 = por %p127, %p128
      %p130 = scmp.ne.s32.totalorder %s116, %s117
      %p131 = scmp.eq.s32.totalorder %s19, 3
      %p132 = por %p130, %p131
      %p134 = scmp.ne.s32.totalorder %s117, %s133
      %p135 = scmp.eq.s32.totalorder %s19, 0
      %p136 = por %p134, %p135
      %s137 = ssub.s32 %s20, %s32
      %s138 = ssub.s32 %s21, %s28
      %s139 = sor.u32 %s137, %s138
      %p140 = scmp.eq.s32.totalorder %s139, 0
      %s142 = sadd.s32 %s141, 1
      %s143 = scalar_select %p140, %s141, %s142
      %p146 = pneg %p140
      %p147 = scmp.eq.s32.totalorder %s13, 3
      %p148 = por %p146, %p147
      %p149 = scmp.ne.s32.totalorder %s141, %s144
      %p150 = scmp.eq.s32.totalorder %s13, 0
      %p151 = por %p149, %p150
      %p152 = scmp.ne.s32.totalorder %s141, %s144
      %p153 = scmp.eq.s32.totalorder %s18, 3
      %p154 = por %p152, %p153
      %p155 = scmp.ne.s32.totalorder %s144, %s145
      %p156 = scmp.eq.s32.totalorder %s18, 0
      %p157 = por %p155, %p156
      %p158 = scmp.ne.s32.totalorder %s144, %s145
      %p159 = scmp.eq.s32.totalorder %s19, 3
      %p160 = por %p158, %p159
      %p162 = scmp.ne.s32.totalorder %s145, %s161
      %p163 = scmp.eq.s32.totalorder %s19, 0
      %p164 = por %p162, %p163
      %p165 = scmp.le.s32.totalorder 1, %s13
      %p166 = scmp.lt.s32.totalorder %s13, 5
      %p167 = pnand %p165, %p166
      %p168 = pneg %p167
      // Predicated region
      $region9: #{conv_bn.1} parent=5 // pred_check
        _
      $region10: #{conv_bn.1} parent=5 // pred_check_branch
        %170 = sbr.rel (%p167) target = $region12
      $region11: #{conv_bn.1} parent=5 // pred_region
        %s171 = ssub.s32 %s13, 1
        // Predicated region
        $region13: #{conv_bn.1} parent=11 // pred_check
          %p172 = pneg %p77
        $region14: #{conv_bn.1} parent=11 // pred_check_branch
          %174 = sbr.rel (%p172) target = $region16
        $region15: #{conv_bn.1} parent=11 // pred_region
          %p175 = scmp.lt.s32.totalorder %s23, 0
          %s176 = scalar_select %p175, %s23, 0
          %s177 = smul.addr %s176, 4
          %s178 = scalar_lea.vmem %s1, %s177
        $region16: #{conv_bn.1} parent=11 // pred_fallthru
          _
        // Predicated region
        $region17: #{conv_bn.1} parent=11 // pred_check
          %p179 = pneg %p103
        $region18: #{conv_bn.1} parent=11 // pred_check_branch
          %181 = sbr.rel (%p179) target = $region20
        $region19: #{conv_bn.1} parent=11 // pred_region
          %p182 = scmp.lt.s32.totalorder %s23, 0
          %s183 = scalar_select %p182, %s23, 0
          %s184 = scalar_lea.vmem %s2, %s183
        $region20: #{conv_bn.1} parent=11 // pred_fallthru
          _
        // Predicated region
        $region21: #{conv_bn.1} parent=11 // pred_check
          %p185 = pneg %p129
        $region22: #{conv_bn.1} parent=11 // pred_check_branch
          %187 = sbr.rel (%p185) target = $region24
        $region23: #{conv_bn.1} parent=11 // pred_region
          %p188 = scmp.lt.s32.totalorder %s23, 0
          %s189 = scalar_select %p188, %s23, 0
          %s190 = scalar_lea.vmem %s3, %s189
        $region24: #{conv_bn.1} parent=11 // pred_fallthru
          _
      $region12: #{conv_bn.1} parent=5 // pred_fallthru
        _
      %p191 = scmp.lt.s32.totalorder %s13, 4
      // Predicated region
      $region25: #{conv_bn.1} parent=5 // pred_check
        %p192 = pneg %p191
      $region26: #{conv_bn.1} parent=5 // pred_check_branch
        %194 = sbr.rel (%p192) target = $region28
      $region27: #{conv_bn.1} parent=5 // pred_region
        // Predicated region
        $region29: #{conv_bn.1} parent=27 // pred_check
          %p195 = pneg %p45
        $region30: #{conv_bn.1} parent=27 // pred_check_branch
          %197 = sbr.rel (%p195) target = $region32
        $region31: #{conv_bn.1} parent=27 // pred_region
          %s198 = smul.u32 64, %s20
          %p199 = scmp.lt.s32.totalorder %s198, 255
          %s200 = scalar_select %p199, %s198, 255
          %s201 = smul.addr %s200, 2
          %s202 = smul.addr %s201, 4
          %s203 = scalar_lea.vmem %s0, %s202
          %s204 = smul.u32 64, %s20
        $region32: #{conv_bn.1} parent=27 // pred_fallthru
          _
      $region28: #{conv_bn.1} parent=5 // pred_fallthru
        _
      %p205 = scmp.le.s32.totalorder 1, %s13
      %p206 = scmp.lt.s32.totalorder %s13, 5
      %p207 = pnand %p205, %p206
      %p208 = pneg %p207
      // Predicated region
      $region33: #{conv_bn.1} parent=5 // pred_check
        _
      $region34: #{conv_bn.1} parent=5 // pred_check_branch
        %210 = sbr.rel (%p207) target = $region36
      $region35: #{conv_bn.1} parent=5 // pred_region
        %s211 = ssub.s32 %s13, 1
        %s212 = smul.u32 64, %s22
        %p213 = scmp.lt.s32.totalorder %s212, 255
        %s214 = scalar_select %p213, %s212, 255
        %s215 = smul.addr %s214, 2
        %s216 = smul.addr %s215, 4
        %s217 = scalar_lea.vmem %s0, %s216
        %p218 = pneg %p51
        %p219 = pneg %p48
        %p220 = scmp.lt.s32.totalorder %s23, 0
        %s221 = scalar_select %p220, %s23, 0
        %s222 = smul.addr %s221, 4
        %s223 = scalar_lea.vmem %s1, %s222
        %p224 = pneg %p77
        %p225 = pneg %p74
        %p226 = scmp.lt.s32.totalorder %s23, 0
        %s227 = scalar_select %p226, %s23, 0
        %s228 = scalar_lea.vmem %s2, %s227
        %p229 = pneg %p103
        %p230 = pneg %p100
        %p231 = scmp.lt.s32.totalorder %s23, 0
        %s232 = scalar_select %p231, %s23, 0
        %s233 = scalar_lea.vmem %s3, %s232
        %p234 = pneg %p129
        %p235 = pneg %p126
        %p236 = pneg %p157
        %p237 = pneg %p154
        %s238 = sand.u32 %s144, 1
        %s239 = scalar_lea.sflag [#allocation3], %s238
        %s240 = sand.u32 %s144, 1
        %s241 = smul.addr %s240, 256
        %s242 = scalar_lea.vmem [#allocation2], %s241
        %s243 = smul.u32 64, %s22
        %p244 = scmp.lt.s32.totalorder %s243, 255
        %s245 = scalar_select %p244, %s243, 255
        %s246 = smul.addr %s245, 2
        %s247 = smul.addr %s246, 4
        %s248 = scalar_lea.vmem %s0, %s247
        %s249 = smul.u32 64, %s22
        %p250 = scmp.lt.s32.totalorder %s23, 0
        %s251 = scalar_select %p250, %s23, 0
        %s252 = smul.addr %s251, 4
        %s253 = scalar_lea.vmem %s1, %s252
        %p254 = scmp.lt.s32.totalorder %s23, 0
        %s255 = scalar_select %p254, %s23, 0
        %s256 = scalar_lea.vmem %s2, %s255
        %p257 = scmp.lt.s32.totalorder %s23, 0
        %s258 = scalar_select %p257, %s23, 0
        %s259 = scalar_lea.vmem %s3, %s258
        %s260 = smul.u32 64, %s22
        %v261 = vld [vmem:[%s248] sm:$0xff]
        %v262 = vld [vmem:[%s248 + $0x8] sm:$0xff]
        %v263 = vld [vmem:[%s248 + $0x10] sm:$0xff]
        %v264 = vld [vmem:[%s248 + $0x18] sm:$0xff]
        %v265 = vld [vmem:[%s248 + $0x20] sm:$0xff]
        %v266 = vld [vmem:[%s248 + $0x28] sm:$0xff]
        %v267 = vld [vmem:[%s248 + $0x30] sm:$0xff]
        %v268 = vld [vmem:[%s248 + $0x38] sm:$0xff]
        %v269 = vld [vmem:[%s248 + $0x40] sm:$0xff]
        %v270 = vld [vmem:[%s248 + $0x48] sm:$0xff]
        %v271 = vld [vmem:[%s248 + $0x50] sm:$0xff]
        %v272 = vld [vmem:[%s248 + $0x58] sm:$0xff]
        %v273 = vld [vmem:[%s248 + $0x60] sm:$0xff]
        %v274 = vld [vmem:[%s248 + $0x68] sm:$0xff]
        %v275 = vld [vmem:[%s248 + $0x70] sm:$0xff]
        %v276 = vld [vmem:[%s248 + $0x78] sm:$0xff]
        %v277 = vld [vmem:[%s248 + $0x80] sm:$0xff]
        %v278 = vld [vmem:[%s248 + $0x88] sm:$0xff]
        %v279 = vld [vmem:[%s248 + $0x90] sm:$0xff]
        %v280 = vld [vmem:[%s248 + $0x98] sm:$0xff]
        %v281 = vld [vmem:[%s248 + $0xa0] sm:$0xff]
        %v282 = vld [vmem:[%s248 + $0xa8] sm:$0xff]
        %v283 = vld [vmem:[%s248 + $0xb0] sm:$0xff]
        %v284 = vld [vmem:[%s248 + $0xb8] sm:$0xff]
        %v285 = vld [vmem:[%s248 + $0xc0] sm:$0xff]
        %v286 = vld [vmem:[%s248 + $0xc8] sm:$0xff]
        %v287 = vld [vmem:[%s248 + $0xd0] sm:$0xff]
        %v288 = vld [vmem:[%s248 + $0xd8] sm:$0xff]
        %v289 = vld [vmem:[%s248 + $0xe0] sm:$0xff]
        %v290 = vld [vmem:[%s248 + $0xe8] sm:$0xff]
        %v291 = vld [vmem:[%s248 + $0xf0] sm:$0xff]
        %v292 = vld [vmem:[%s248 + $0xf8] sm:$0xff]
        %v293 = vld [vmem:[%s248 + $0x100] sm:$0xff]
        %v294 = vld [vmem:[%s248 + $0x108] sm:$0xff]
        %v295 = vld [vmem:[%s248 + $0x110] sm:$0xff]
        %v296 = vld [vmem:[%s248 + $0x118] sm:$0xff]
        %v297 = vld [vmem:[%s248 + $0x120] sm:$0xff]
        %v298 = vld [vmem:[%s248 + $0x128] sm:$0xff]
        %v299 = vld [vmem:[%s248 + $0x130] sm:$0xff]
        %v300 = vld [vmem:[%s248 + $0x138] sm:$0xff]
        %v301 = vld [vmem:[%s248 + $0x140] sm:$0xff]
        %v302 = vld [vmem:[%s248 + $0x148] sm:$0xff]
        %v303 = vld [vmem:[%s248 + $0x150] sm:$0xff]
        %v304 = vld [vmem:[%s248 + $0x158] sm:$0xff]
        %v305 = vld [vmem:[%s248 + $0x160] sm:$0xff]
        %v306 = vld [vmem:[%s248 + $0x168] sm:$0xff]
        %v307 = vld [vmem:[%s248 + $0x170] sm:$0xff]
        %v308 = vld [vmem:[%s248 + $0x178] sm:$0xff]
        %v309 = vld [vmem:[%s248 + $0x180] sm:$0xff]
        %v310 = vld [vmem:[%s248 + $0x188] sm:$0xff]
        %v311 = vld [vmem:[%s248 + $0x190] sm:$0xff]
        %v312 = vld [vmem:[%s248 + $0x198] sm:$0xff]
        %v313 = vld [vmem:[%s248 + $0x1a0] sm:$0xff]
        %v314 = vld [vmem:[%s248 + $0x1a8] sm:$0xff]
        %v315 = vld [vmem:[%s248 + $0x1b0] sm:$0xff]
        %v316 = vld [vmem:[%s248 + $0x1b8] sm:$0xff]
        %v317 = vld [vmem:[%s248 + $0x1c0] sm:$0xff]
        %v318 = vld [vmem:[%s248 + $0x1c8] sm:$0xff]
        %v319 = vld [vmem:[%s248 + $0x1d0] sm:$0xff]
        %v320 = vld [vmem:[%s248 + $0x1d8] sm:$0xff]
        %v321 = vld [vmem:[%s248 + $0x1e0] sm:$0xff]
        %v322 = vld [vmem:[%s248 + $0x1e8] sm:$0xff]
        %v323 = vld [vmem:[%s248 + $0x1f0] sm:$0xff]
        %v324 = vld [vmem:[%s248 + $0x1f8] sm:$0xff]
        %v325 = vld [vmem:[%s253] sm:$0xf]
        %v326 = vld [vmem:[%s253 + $0x4] sm:$0xf]
        %v327 = vld [vmem:[%s253 + $0x8] sm:$0xf]
        %v328 = vld [vmem:[%s253 + $0xc] sm:$0xf]
        %v329 = vld [vmem:[%s253 + $0x10] sm:$0xf]
        %v330 = vld [vmem:[%s253 + $0x14] sm:$0xf]
        %v331 = vld [vmem:[%s253 + $0x18] sm:$0xf]
        %v332 = vld [vmem:[%s253 + $0x1c] sm:$0xf]
        %v333 = vld [vmem:[%s253 + $0x20] sm:$0xf]
        %v334 = vld [vmem:[%s253 + $0x24] sm:$0xf]
        %v335 = vld [vmem:[%s253 + $0x28] sm:$0xf]
        %v336 = vld [vmem:[%s253 + $0x2c] sm:$0xf]
        %v337 = vld [vmem:[%s253 + $0x30] sm:$0xf]
        %v338 = vld [vmem:[%s253 + $0x34] sm:$0xf]
        %v339 = vld [vmem:[%s253 + $0x38] sm:$0xf]
        %v340 = vld [vmem:[%s253 + $0x3c] sm:$0xf]
        %v341 = vld [vmem:[%s253 + $0x40] sm:$0xf]
        %v342 = vld [vmem:[%s253 + $0x44] sm:$0xf]
        %v343 = vld [vmem:[%s253 + $0x48] sm:$0xf]
        %v344 = vld [vmem:[%s253 + $0x4c] sm:$0xf]
        %v345 = vld [vmem:[%s253 + $0x50] sm:$0xf]
        %v346 = vld [vmem:[%s253 + $0x54] sm:$0xf]
        %v347 = vld [vmem:[%s253 + $0x58] sm:$0xf]
        %v348 = vld [vmem:[%s253 + $0x5c] sm:$0xf]
        %v349 = vld [vmem:[%s253 + $0x60] sm:$0xf]
        %v350 = vld [vmem:[%s253 + $0x64] sm:$0xf]
        %v351 = vld [vmem:[%s253 + $0x68] sm:$0xf]
        %v352 = vld [vmem:[%s253 + $0x6c] sm:$0xf]
        %v353 = vld [vmem:[%s253 + $0x70] sm:$0xf]
        %v354 = vld [vmem:[%s253 + $0x74] sm:$0xf]
        %v355 = vld [vmem:[%s253 + $0x78] sm:$0xf]
        %v356 = vld [vmem:[%s253 + $0x7c] sm:$0xf]
        %v421 = vunpack.c.l.b16 %v261
        %v422 = vunpack.c.h.b16 %v261
        %v423 = vunpack.c.l.b16 %v262
        %v424 = vunpack.c.h.b16 %v262
        %v425 = vunpack.c.l.b16 %v263
        %v426 = vunpack.c.h.b16 %v263
        %v427 = vunpack.c.l.b16 %v264
        %v428 = vunpack.c.h.b16 %v264
        %v429 = vunpack.c.l.b16 %v265
        %v430 = vunpack.c.h.b16 %v265
        %v431 = vunpack.c.l.b16 %v266
        %v432 = vunpack.c.h.b16 %v266
        %v433 = vunpack.c.l.b16 %v267
        %v434 = vunpack.c.h.b16 %v267
        %v435 = vunpack.c.l.b16 %v268
        %v436 = vunpack.c.h.b16 %v268
        %v437 = vunpack.c.l.b16 %v269
        %v438 = vunpack.c.h.b16 %v269
        %v439 = vunpack.c.l.b16 %v270
        %v440 = vunpack.c.h.b16 %v270
        %v441 = vunpack.c.l.b16 %v271
        %v442 = vunpack.c.h.b16 %v271
        %v443 = vunpack.c.l.b16 %v272
        %v444 = vunpack.c.h.b16 %v272
        %v445 = vunpack.c.l.b16 %v273
        %v446 = vunpack.c.h.b16 %v273
        %v447 = vunpack.c.l.b16 %v274
        %v448 = vunpack.c.h.b16 %v274
        %v449 = vunpack.c.l.b16 %v275
        %v450 = vunpack.c.h.b16 %v275
        %v451 = vunpack.c.l.b16 %v276
        %v452 = vunpack.c.h.b16 %v276
        %v453 = vunpack.c.l.b16 %v277
        %v454 = vunpack.c.h.b16 %v277
        %v455 = vunpack.c.l.b16 %v278
        %v456 = vunpack.c.h.b16 %v278
        %v457 = vunpack.c.l.b16 %v279
        %v458 = vunpack.c.h.b16 %v279
        %v459 = vunpack.c.l.b16 %v280
        %v460 = vunpack.c.h.b16 %v280
        %v461 = vunpack.c.l.b16 %v281
        %v462 = vunpack.c.h.b16 %v281
        %v463 = vunpack.c.l.b16 %v282
        %v464 = vunpack.c.h.b16 %v282
        %v465 = vunpack.c.l.b16 %v283
        %v466 = vunpack.c.h.b16 %v283
        %v467 = vunpack.c.l.b16 %v284
        %v468 = vunpack.c.h.b16 %v284
        %v469 = vunpack.c.l.b16 %v285
        %v470 = vunpack.c.h.b16 %v285
        %v471 = vunpack.c.l.b16 %v286
        %v472 = vunpack.c.h.b16 %v286
        %v473 = vunpack.c.l.b16 %v287
        %v474 = vunpack.c.h.b16 %v287
        %v475 = vunpack.c.l.b16 %v288
        %v476 = vunpack.c.h.b16 %v288
        %v477 = vunpack.c.l.b16 %v289
        %v478 = vunpack.c.h.b16 %v289
        %v479 = vunpack.c.l.b16 %v290
        %v480 = vunpack.c.h.b16 %v290
        %v481 = vunpack.c.l.b16 %v291
        %v482 = vunpack.c.h.b16 %v291
        %v483 = vunpack.c.l.b16 %v292
        %v484 = vunpack.c.h.b16 %v292
        %v485 = vunpack.c.l.b16 %v293
        %v486 = vunpack.c.h.b16 %v293
        %v487 = vunpack.c.l.b16 %v294
        %v488 = vunpack.c.h.b16 %v294
        %v489 = vunpack.c.l.b16 %v295
        %v490 = vunpack.c.h.b16 %v295
        %v491 = vunpack.c.l.b16 %v296
        %v492 = vunpack.c.h.b16 %v296
        %v493 = vunpack.c.l.b16 %v297
        %v494 = vunpack.c.h.b16 %v297
        %v495 = vunpack.c.l.b16 %v298
        %v496 = vunpack.c.h.b16 %v298
        %v497 = vunpack.c.l.b16 %v299
        %v498 = vunpack.c.h.b16 %v299
        %v499 = vunpack.c.l.b16 %v300
        %v500 = vunpack.c.h.b16 %v300
        %v501 = vunpack.c.l.b16 %v301
        %v502 = vunpack.c.h.b16 %v301
        %v503 = vunpack.c.l.b16 %v302
        %v504 = vunpack.c.h.b16 %v302
        %v505 = vunpack.c.l.b16 %v303
        %v506 = vunpack.c.h.b16 %v303
        %v507 = vunpack.c.l.b16 %v304
        %v508 = vunpack.c.h.b16 %v304
        %v509 = vunpack.c.l.b16 %v305
        %v510 = vunpack.c.h.b16 %v305
        %v511 = vunpack.c.l.b16 %v306
        %v512 = vunpack.c.h.b16 %v306
        %v513 = vunpack.c.l.b16 %v307
        %v514 = vunpack.c.h.b16 %v307
        %v515 = vunpack.c.l.b16 %v308
        %v516 = vunpack.c.h.b16 %v308
        %v517 = vunpack.c.l.b16 %v309
        %v518 = vunpack.c.h.b16 %v309
        %v519 = vunpack.c.l.b16 %v310
        %v520 = vunpack.c.h.b16 %v310
        %v521 = vunpack.c.l.b16 %v311
        %v522 = vunpack.c.h.b16 %v311
        %v523 = vunpack.c.l.b16 %v312
        %v524 = vunpack.c.h.b16 %v312
        %v525 = vunpack.c.l.b16 %v313
        %v526 = vunpack.c.h.b16 %v313
        %v527 = vunpack.c.l.b16 %v314
        %v528 = vunpack.c.h.b16 %v314
        %v529 = vunpack.c.l.b16 %v315
        %v530 = vunpack.c.h.b16 %v315
        %v531 = vunpack.c.l.b16 %v316
        %v532 = vunpack.c.h.b16 %v316
        %v533 = vunpack.c.l.b16 %v317
        %v534 = vunpack.c.h.b16 %v317
        %v535 = vunpack.c.l.b16 %v318
        %v536 = vunpack.c.h.b16 %v318
        %v537 = vunpack.c.l.b16 %v319
        %v538 = vunpack.c.h.b16 %v319
        %v539 = vunpack.c.l.b16 %v320
        %v540 = vunpack.c.h.b16 %v320
        %v541 = vunpack.c.l.b16 %v321
        %v542 = vunpack.c.h.b16 %v321
        %v543 = vunpack.c.l.b16 %v322
        %v544 = vunpack.c.h.b16 %v322
        %v545 = vunpack.c.l.b16 %v323
        %v546 = vunpack.c.h.b16 %v323
        %v547 = vunpack.c.l.b16 %v324
        %v548 = vunpack.c.h.b16 %v324
        %v549 = vpack.c.b16 %v423, %v421
        %v550 = vpack.c.b16 %v424, %v422
        %v551 = vpack.c.b16 %v427, %v425
        %v552 = vpack.c.b16 %v428, %v426
        %v553 = vpack.c.b16 %v431, %v429
        %v554 = vpack.c.b16 %v432, %v430
        %v555 = vpack.c.b16 %v435, %v433
        %v556 = vpack.c.b16 %v436, %v434
        %v557 = vpack.c.b16 %v439, %v437
        %v558 = vpack.c.b16 %v440, %v438
        %v559 = vpack.c.b16 %v443, %v441
        %v560 = vpack.c.b16 %v444, %v442
        %v561 = vpack.c.b16 %v447, %v445
        %v562 = vpack.c.b16 %v448, %v446
        %v563 = vpack.c.b16 %v451, %v449
        %v564 = vpack.c.b16 %v452, %v450
        %v565 = vpack.c.b16 %v455, %v453
        %v566 = vpack.c.b16 %v456, %v454
        %v567 = vpack.c.b16 %v459, %v457
        %v568 = vpack.c.b16 %v460, %v458
        %v569 = vpack.c.b16 %v463, %v461
        %v570 = vpack.c.b16 %v464, %v462
        %v571 = vpack.c.b16 %v467, %v465
        %v572 = vpack.c.b16 %v468, %v466
        %v573 = vpack.c.b16 %v471, %v469
        %v574 = vpack.c.b16 %v472, %v470
        %v575 = vpack.c.b16 %v475, %v473
        %v576 = vpack.c.b16 %v476, %v474
        %v577 = vpack.c.b16 %v479, %v477
        %v578 = vpack.c.b16 %v480, %v478
        %v579 = vpack.c.b16 %v483, %v481
        %v580 = vpack.c.b16 %v484, %v482
        %v581 = vpack.c.b16 %v487, %v485
        %v582 = vpack.c.b16 %v488, %v486
        %v583 = vpack.c.b16 %v491, %v489
        %v584 = vpack.c.b16 %v492, %v490
        %v585 = vpack.c.b16 %v495, %v493
        %v586 = vpack.c.b16 %v496, %v494
        %v587 = vpack.c.b16 %v499, %v497
        %v588 = vpack.c.b16 %v500, %v498
        %v589 = vpack.c.b16 %v503, %v501
        %v590 = vpack.c.b16 %v504, %v502
        %v591 = vpack.c.b16 %v507, %v505
        %v592 = vpack.c.b16 %v508, %v506
        %v593 = vpack.c.b16 %v511, %v509
        %v594 = vpack.c.b16 %v512, %v510
        %v595 = vpack.c.b16 %v515, %v513
        %v596 = vpack.c.b16 %v516, %v514
        %v597 = vpack.c.b16 %v519, %v517
        %v598 = vpack.c.b16 %v520, %v518
        %v599 = vpack.c.b16 %v523, %v521
        %v600 = vpack.c.b16 %v524, %v522
        %v601 = vpack.c.b16 %v527, %v525
        %v602 = vpack.c.b16 %v528, %v526
        %v603 = vpack.c.b16 %v531, %v529
        %v604 = vpack.c.b16 %v532, %v530
        %v605 = vpack.c.b16 %v535, %v533
        %v606 = vpack.c.b16 %v536, %v534
        %v607 = vpack.c.b16 %v539, %v537
        %v608 = vpack.c.b16 %v540, %v538
        %v609 = vpack.c.b16 %v543, %v541
        %v610 = vpack.c.b16 %v544, %v542
        %v611 = vpack.c.b16 %v547, %v545
        %v612 = vpack.c.b16 %v548, %v546
        %v709 = vunpack.c.l.b16 %v325
        %v710 = vunpack.c.l.b16 %v326
        %v711 = vunpack.c.l.b16 %v327
        %v712 = vunpack.c.l.b16 %v328
        %v713 = vunpack.c.l.b16 %v329
        %v714 = vunpack.c.l.b16 %v330
        %v715 = vunpack.c.l.b16 %v331
        %v716 = vunpack.c.l.b16 %v332
        %v717 = vunpack.c.l.b16 %v333
        %v718 = vunpack.c.l.b16 %v334
        %v719 = vunpack.c.l.b16 %v335
        %v720 = vunpack.c.l.b16 %v336
        %v721 = vunpack.c.l.b16 %v337
        %v722 = vunpack.c.l.b16 %v338
        %v723 = vunpack.c.l.b16 %v339
        %v724 = vunpack.c.l.b16 %v340
        %v725 = vunpack.c.l.b16 %v341
        %v726 = vunpack.c.l.b16 %v342
        %v727 = vunpack.c.l.b16 %v343
        %v728 = vunpack.c.l.b16 %v344
        %v729 = vunpack.c.l.b16 %v345
        %v730 = vunpack.c.l.b16 %v346
        %v731 = vunpack.c.l.b16 %v347
        %v732 = vunpack.c.l.b16 %v348
        %v733 = vunpack.c.l.b16 %v349
        %v734 = vunpack.c.l.b16 %v350
        %v735 = vunpack.c.l.b16 %v351
        %v736 = vunpack.c.l.b16 %v352
        %v737 = vunpack.c.l.b16 %v353
        %v738 = vunpack.c.l.b16 %v354
        %v739 = vunpack.c.l.b16 %v355
        %v740 = vunpack.c.l.b16 %v356
        %v741 = vpack.c.b16 %v710, %v709
        %v742 = vpack.c.b16 %v712, %v711
        %v743 = vpack.c.b16 %v714, %v713
        %v744 = vpack.c.b16 %v716, %v715
        %v745 = vpack.c.b16 %v718, %v717
        %v746 = vpack.c.b16 %v720, %v719
        %v747 = vpack.c.b16 %v722, %v721
        %v748 = vpack.c.b16 %v724, %v723
        %v749 = vpack.c.b16 %v726, %v725
        %v750 = vpack.c.b16 %v728, %v727
        %v751 = vpack.c.b16 %v730, %v729
        %v752 = vpack.c.b16 %v732, %v731
        %v753 = vpack.c.b16 %v734, %v733
        %v754 = vpack.c.b16 %v736, %v735
        %v755 = vpack.c.b16 %v738, %v737
        %v756 = vpack.c.b16 %v740, %v739
        %773 = vmatpush.bf16.msra.mxu0 %v748
        %774 = vmatpush.bf16.msra.mxu0 %v747
        %775 = vmatpush.bf16.msra.mxu0 %v746
        %776 = vmatpush.bf16.msra.mxu0 %v745
        %777 = vmatpush.bf16.msra.mxu0 %v744
        %778 = vmatpush.bf16.msra.mxu0 %v743
        %779 = vmatpush.bf16.msra.mxu0 %v742
        %780 = vmatpush.bf16.msra.mxu0 %v741
        %781 = vmatmul.bf16.gmra.mxu0 %v549
        %v782 = vpop.f32.mrf.mxu0
        %v783 = vadd.f32 0.0, %v782
        %v784 = vpop.f32.mrf.mxu0
        %v785 = vadd.f32 0.0, %v784
        %786 = vmatmul.bf16.gmra.mxu0 %v551
        %v787 = vpop.f32.mrf.mxu0
        %v788 = vadd.f32 0.0, %v787
        %v789 = vpop.f32.mrf.mxu0
        %v790 = vadd.f32 0.0, %v789
        %791 = vmatmul.bf16.gmra.mxu0 %v553
        %v792 = vpop.f32.mrf.mxu0
        %v793 = vadd.f32 0.0, %v792
        %v794 = vpop.f32.mrf.mxu0
        %v795 = vadd.f32 0.0, %v794
        %796 = vmatmul.bf16.gmra.mxu0 %v555
        %v797 = vpop.f32.mrf.mxu0
        %v798 = vadd.f32 0.0, %v797
        %v799 = vpop.f32.mrf.mxu0
        %v800 = vadd.f32 0.0, %v799
        %801 = vmatmul.bf16.gmra.mxu0 %v557
        %v802 = vpop.f32.mrf.mxu0
        %v803 = vadd.f32 0.0, %v802
        %v804 = vpop.f32.mrf.mxu0
        %v805 = vadd.f32 0.0, %v804
        %806 = vmatmul.bf16.gmra.mxu0 %v559
        %v807 = vpop.f32.mrf.mxu0
        %v808 = vadd.f32 0.0, %v807
        %v809 = vpop.f32.mrf.mxu0
        %v810 = vadd.f32 0.0, %v809
        %811 = vmatmul.bf16.gmra.mxu0 %v561
        %v812 = vpop.f32.mrf.mxu0
        %v813 = vadd.f32 0.0, %v812
        %v814 = vpop.f32.mrf.mxu0
        %v815 = vadd.f32 0.0, %v814
        %816 = vmatmul.bf16.gmra.mxu0 %v563
        %v817 = vpop.f32.mrf.mxu0
        %v818 = vadd.f32 0.0, %v817
        %v819 = vpop.f32.mrf.mxu0
        %v820 = vadd.f32 0.0, %v819
        %821 = vmatmul.bf16.gmra.mxu0 %v565
        %v822 = vpop.f32.mrf.mxu0
        %v823 = vadd.f32 0.0, %v822
        %v824 = vpop.f32.mrf.mxu0
        %v825 = vadd.f32 0.0, %v824
        %826 = vmatmul.bf16.gmra.mxu0 %v567
        %v827 = vpop.f32.mrf.mxu0
        %v828 = vadd.f32 0.0, %v827
        %v829 = vpop.f32.mrf.mxu0
        %v830 = vadd.f32 0.0, %v829
        %831 = vmatmul.bf16.gmra.mxu0 %v569
        %v832 = vpop.f32.mrf.mxu0
        %v833 = vadd.f32 0.0, %v832
        %v834 = vpop.f32.mrf.mxu0
        %v835 = vadd.f32 0.0, %v834
        %836 = vmatmul.bf16.gmra.mxu0 %v571
        %v837 = vpop.f32.mrf.mxu0
        %v838 = vadd.f32 0.0, %v837
        %v839 = vpop.f32.mrf.mxu0
        %v840 = vadd.f32 0.0, %v839
        %841 = vmatmul.bf16.gmra.mxu0 %v573
        %v842 = vpop.f32.mrf.mxu0
        %v843 = vadd.f32 0.0, %v842
        %v844 = vpop.f32.mrf.mxu0
        %v845 = vadd.f32 0.0, %v844
        %846 = vmatmul.bf16.gmra.mxu0 %v575
        %v847 = vpop.f32.mrf.mxu0
        %v848 = vadd.f32 0.0, %v847
        %v849 = vpop.f32.mrf.mxu0
        %v850 = vadd.f32 0.0, %v849
        %851 = vmatmul.bf16.gmra.mxu0 %v577
        %v852 = vpop.f32.mrf.mxu0
        %v853 = vadd.f32 0.0, %v852
        %v854 = vpop.f32.mrf.mxu0
        %v855 = vadd.f32 0.0, %v854
        %856 = vmatmul.bf16.gmra.mxu0 %v579
        %v857 = vpop.f32.mrf.mxu0
        %v858 = vadd.f32 0.0, %v857
        %v859 = vpop.f32.mrf.mxu0
        %v860 = vadd.f32 0.0, %v859
        %861 = vmatmul.bf16.gmra.mxu0 %v581
        %v862 = vpop.f32.mrf.mxu0
        %v863 = vadd.f32 0.0, %v862
        %v864 = vpop.f32.mrf.mxu0
        %v865 = vadd.f32 0.0, %v864
        %866 = vmatmul.bf16.gmra.mxu0 %v583
        %v867 = vpop.f32.mrf.mxu0
        %v868 = vadd.f32 0.0, %v867
        %v869 = vpop.f32.mrf.mxu0
        %v870 = vadd.f32 0.0, %v869
        %871 = vmatmul.bf16.gmra.mxu0 %v585
        %v872 = vpop.f32.mrf.mxu0
        %v873 = vadd.f32 0.0, %v872
        %v874 = vpop.f32.mrf.mxu0
        %v875 = vadd.f32 0.0, %v874
        %876 = vmatmul.bf16.gmra.mxu0 %v587
        %v877 = vpop.f32.mrf.mxu0
        %v878 = vadd.f32 0.0, %v877
        %v879 = vpop.f32.mrf.mxu0
        %v880 = vadd.f32 0.0, %v879
        %881 = vmatmul.bf16.gmra.mxu0 %v589
        %v882 = vpop.f32.mrf.mxu0
        %v883 = vadd.f32 0.0, %v882
        %v884 = vpop.f32.mrf.mxu0
        %v885 = vadd.f32 0.0, %v884
        %886 = vmatmul.bf16.gmra.mxu0 %v591
        %v887 = vpop.f32.mrf.mxu0
        %v888 = vadd.f32 0.0, %v887
        %v889 = vpop.f32.mrf.mxu0
        %v890 = vadd.f32 0.0, %v889
        %891 = vmatmul.bf16.gmra.mxu0 %v593
        %v892 = vpop.f32.mrf.mxu0
        %v893 = vadd.f32 0.0, %v892
        %v894 = vpop.f32.mrf.mxu0
        %v895 = vadd.f32 0.0, %v894
        %896 = vmatmul.bf16.gmra.mxu0 %v595
        %v897 = vpop.f32.mrf.mxu0
        %v898 = vadd.f32 0.0, %v897
        %v899 = vpop.f32.mrf.mxu0
        %v900 = vadd.f32 0.0, %v899
        %901 = vmatmul.bf16.gmra.mxu0 %v597
        %v902 = vpop.f32.mrf.mxu0
        %v903 = vadd.f32 0.0, %v902
        %v904 = vpop.f32.mrf.mxu0
        %v905 = vadd.f32 0.0, %v904
        %906 = vmatmul.bf16.gmra.mxu0 %v599
        %v907 = vpop.f32.mrf.mxu0
        %v908 = vadd.f32 0.0, %v907
        %v909 = vpop.f32.mrf.mxu0
        %v910 = vadd.f32 0.0, %v909
        %911 = vmatmul.bf16.gmra.mxu0 %v601
        %v912 = vpop.f32.mrf.mxu0
        %v913 = vadd.f32 0.0, %v912
        %v914 = vpop.f32.mrf.mxu0
        %v915 = vadd.f32 0.0, %v914
        %916 = vmatmul.bf16.gmra.mxu0 %v603
        %v917 = vpop.f32.mrf.mxu0
        %v918 = vadd.f32 0.0, %v917
        %v919 = vpop.f32.mrf.mxu0
        %v920 = vadd.f32 0.0, %v919
        %921 = vmatmul.bf16.gmra.mxu0 %v605
        %v922 = vpop.f32.mrf.mxu0
        %v923 = vadd.f32 0.0, %v922
        %v924 = vpop.f32.mrf.mxu0
        %v925 = vadd.f32 0.0, %v924
        %926 = vmatmul.bf16.gmra.mxu0 %v607
        %v927 = vpop.f32.mrf.mxu0
        %v928 = vadd.f32 0.0, %v927
        %v929 = vpop.f32.mrf.mxu0
        %v930 = vadd.f32 0.0, %v929
        %931 = vmatmul.bf16.gmra.mxu0 %v609
        %v932 = vpop.f32.mrf.mxu0
        %v933 = vadd.f32 0.0, %v932
        %v934 = vpop.f32.mrf.mxu0
        %v935 = vadd.f32 0.0, %v934
        %936 = vmatmul.bf16.gmra.mxu0 %v611
        %v937 = vpop.f32.mrf.mxu0
        %v938 = vadd.f32 0.0, %v937
        %v939 = vpop.f32.mrf.mxu0
        %v940 = vadd.f32 0.0, %v939
        %941 = vdwg.mxu0
        %942 = vmatpush.bf16.msra.mxu0 %v756
        %943 = vmatpush.bf16.msra.mxu0 %v755
        %944 = vmatpush.bf16.msra.mxu0 %v754
        %945 = vmatpush.bf16.msra.mxu0 %v753
        %946 = vmatpush.bf16.msra.mxu0 %v752
        %947 = vmatpush.bf16.msra.mxu0 %v751
        %948 = vmatpush.bf16.msra.mxu0 %v750
        %949 = vmatpush.bf16.msra.mxu0 %v749
        %950 = vmatmul.bf16.gmra.mxu0 %v550
        %v951 = vpop.f32.mrf.mxu0
        %v952 = vadd.f32 %v783, %v951
        %v953 = vpop.f32.mrf.mxu0
        %v954 = vadd.f32 %v785, %v953
        %955 = vmatmul.bf16.gmra.mxu0 %v552
        %v956 = vpop.f32.mrf.mxu0
        %v957 = vadd.f32 %v788, %v956
        %v958 = vpop.f32.mrf.mxu0
        %v959 = vadd.f32 %v790, %v958
        %960 = vmatmul.bf16.gmra.mxu0 %v554
        %v961 = vpop.f32.mrf.mxu0
        %v962 = vadd.f32 %v793, %v961
        %v963 = vpop.f32.mrf.mxu0
        %v964 = vadd.f32 %v795, %v963
        %965 = vmatmul.bf16.gmra.mxu0 %v556
        %v966 = vpop.f32.mrf.mxu0
        %v967 = vadd.f32 %v798, %v966
        %v968 = vpop.f32.mrf.mxu0
        %v969 = vadd.f32 %v800, %v968
        %970 = vmatmul.bf16.gmra.mxu0 %v558
        %v971 = vpop.f32.mrf.mxu0
        %v972 = vadd.f32 %v803, %v971
        %v973 = vpop.f32.mrf.mxu0
        %v974 = vadd.f32 %v805, %v973
        %975 = vmatmul.bf16.gmra.mxu0 %v560
        %v976 = vpop.f32.mrf.mxu0
        %v977 = vadd.f32 %v808, %v976
        %v978 = vpop.f32.mrf.mxu0
        %v979 = vadd.f32 %v810, %v978
        %980 = vmatmul.bf16.gmra.mxu0 %v562
        %v981 = vpop.f32.mrf.mxu0
        %v982 = vadd.f32 %v813, %v981
        %v983 = vpop.f32.mrf.mxu0
        %v984 = vadd.f32 %v815, %v983
        %985 = vmatmul.bf16.gmra.mxu0 %v564
        %v986 = vpop.f32.mrf.mxu0
        %v987 = vadd.f32 %v818, %v986
        %v988 = vpop.f32.mrf.mxu0
        %v989 = vadd.f32 %v820, %v988
        %990 = vmatmul.bf16.gmra.mxu0 %v566
        %v991 = vpop.f32.mrf.mxu0
        %v992 = vadd.f32 %v823, %v991
        %v993 = vpop.f32.mrf.mxu0
        %v994 = vadd.f32 %v825, %v993
        %995 = vmatmul.bf16.gmra.mxu0 %v568
        %v996 = vpop.f32.mrf.mxu0
        %v997 = vadd.f32 %v828, %v996
        %v998 = vpop.f32.mrf.mxu0
        %v999 = vadd.f32 %v830, %v998
        %1000 = vmatmul.bf16.gmra.mxu0 %v570
        %v1001 = vpop.f32.mrf.mxu0
        %v1002 = vadd.f32 %v833, %v1001
        %v1003 = vpop.f32.mrf.mxu0
        %v1004 = vadd.f32 %v835, %v1003
        %1005 = vmatmul.bf16.gmra.mxu0 %v572
        %v1006 = vpop.f32.mrf.mxu0
        %v1007 = vadd.f32 %v838, %v1006
        %v1008 = vpop.f32.mrf.mxu0
        %v1009 = vadd.f32 %v840, %v1008
        %1010 = vmatmul.bf16.gmra.mxu0 %v574
        %v1011 = vpop.f32.mrf.mxu0
        %v1012 = vadd.f32 %v843, %v1011
        %v1013 = vpop.f32.mrf.mxu0
        %v1014 = vadd.f32 %v845, %v1013
        %1015 = vmatmul.bf16.gmra.mxu0 %v576
        %v1016 = vpop.f32.mrf.mxu0
        %v1017 = vadd.f32 %v848, %v1016
        %v1018 = vpop.f32.mrf.mxu0
        %v1019 = vadd.f32 %v850, %v1018
        %1020 = vmatmul.bf16.gmra.mxu0 %v578
        %v1021 = vpop.f32.mrf.mxu0
        %v1022 = vadd.f32 %v853, %v1021
        %v1023 = vpop.f32.mrf.mxu0
        %v1024 = vadd.f32 %v855, %v1023
        %1025 = vmatmul.bf16.gmra.mxu0 %v580
        %v1026 = vpop.f32.mrf.mxu0
        %v1027 = vadd.f32 %v858, %v1026
        %v1028 = vpop.f32.mrf.mxu0
        %v1029 = vadd.f32 %v860, %v1028
        %1030 = vmatmul.bf16.gmra.mxu0 %v582
        %v1031 = vpop.f32.mrf.mxu0
        %v1032 = vadd.f32 %v863, %v1031
        %v1033 = vpop.f32.mrf.mxu0
        %v1034 = vadd.f32 %v865, %v1033
        %1035 = vmatmul.bf16.gmra.mxu0 %v584
        %v1036 = vpop.f32.mrf.mxu0
        %v1037 = vadd.f32 %v868, %v1036
        %v1038 = vpop.f32.mrf.mxu0
        %v1039 = vadd.f32 %v870, %v1038
        %1040 = vmatmul.bf16.gmra.mxu0 %v586
        %v1041 = vpop.f32.mrf.mxu0
        %v1042 = vadd.f32 %v873, %v1041
        %v1043 = vpop.f32.mrf.mxu0
        %v1044 = vadd.f32 %v875, %v1043
        %1045 = vmatmul.bf16.gmra.mxu0 %v588
        %v1046 = vpop.f32.mrf.mxu0
        %v1047 = vadd.f32 %v878, %v1046
        %v1048 = vpop.f32.mrf.mxu0
        %v1049 = vadd.f32 %v880, %v1048
        %1050 = vmatmul.bf16.gmra.mxu0 %v590
        %v1051 = vpop.f32.mrf.mxu0
        %v1052 = vadd.f32 %v883, %v1051
        %v1053 = vpop.f32.mrf.mxu0
        %v1054 = vadd.f32 %v885, %v1053
        %1055 = vmatmul.bf16.gmra.mxu0 %v592
        %v1056 = vpop.f32.mrf.mxu0
        %v1057 = vadd.f32 %v888, %v1056
        %v1058 = vpop.f32.mrf.mxu0
        %v1059 = vadd.f32 %v890, %v1058
        %1060 = vmatmul.bf16.gmra.mxu0 %v594
        %v1061 = vpop.f32.mrf.mxu0
        %v1062 = vadd.f32 %v893, %v1061
        %v1063 = vpop.f32.mrf.mxu0
        %v1064 = vadd.f32 %v895, %v1063
        %1065 = vmatmul.bf16.gmra.mxu0 %v596
        %v1066 = vpop.f32.mrf.mxu0
        %v1067 = vadd.f32 %v898, %v1066
        %v1068 = vpop.f32.mrf.mxu0
        %v1069 = vadd.f32 %v900, %v1068
        %1070 = vmatmul.bf16.gmra.mxu0 %v598
        %v1071 = vpop.f32.mrf.mxu0
        %v1072 = vadd.f32 %v903, %v1071
        %v1073 = vpop.f32.mrf.mxu0
        %v1074 = vadd.f32 %v905, %v1073
        %1075 = vmatmul.bf16.gmra.mxu0 %v600
        %v1076 = vpop.f32.mrf.mxu0
        %v1077 = vadd.f32 %v908, %v1076
        %v1078 = vpop.f32.mrf.mxu0
        %v1079 = vadd.f32 %v910, %v1078
        %1080 = vmatmul.bf16.gmra.mxu0 %v602
        %v1081 = vpop.f32.mrf.mxu0
        %v1082 = vadd.f32 %v913, %v1081
        %v1083 = vpop.f32.mrf.mxu0
        %v1084 = vadd.f32 %v915, %v1083
        %1085 = vmatmul.bf16.gmra.mxu0 %v604
        %v1086 = vpop.f32.mrf.mxu0
        %v1087 = vadd.f32 %v918, %v1086
        %v1088 = vpop.f32.mrf.mxu0
        %v1089 = vadd.f32 %v920, %v1088
        %1090 = vmatmul.bf16.gmra.mxu0 %v606
        %v1091 = vpop.f32.mrf.mxu0
        %v1092 = vadd.f32 %v923, %v1091
        %v1093 = vpop.f32.mrf.mxu0
        %v1094 = vadd.f32 %v925, %v1093
        %1095 = vmatmul.bf16.gmra.mxu0 %v608
        %v1096 = vpop.f32.mrf.mxu0
        %v1097 = vadd.f32 %v928, %v1096
        %v1098 = vpop.f32.mrf.mxu0
        %v1099 = vadd.f32 %v930, %v1098
        %1100 = vmatmul.bf16.gmra.mxu0 %v610
        %v1101 = vpop.f32.mrf.mxu0
        %v1102 = vadd.f32 %v933, %v1101
        %v1103 = vpop.f32.mrf.mxu0
        %v1104 = vadd.f32 %v935, %v1103
        %1105 = vmatmul.bf16.gmra.mxu0 %v612
        %v1106 = vpop.f32.mrf.mxu0
        %v1107 = vadd.f32 %v938, %v1106
        %v1108 = vpop.f32.mrf.mxu0
        %v1109 = vadd.f32 %v940, %v1108
        %1110 = vdwg.mxu0
        %v1111 = vld [vmem:[%s256] sm:$0x1]
        %v1113 = vperm.slane %v1111, 0
        %v1115 = vmul.f32 %v952, %v1113
        %v1116 = vmul.f32 %v954, %v1113
        %v1117 = vmul.f32 %v957, %v1113
        %v1118 = vmul.f32 %v959, %v1113
        %v1119 = vmul.f32 %v962, %v1113
        %v1120 = vmul.f32 %v964, %v1113
        %v1121 = vmul.f32 %v967, %v1113
        %v1122 = vmul.f32 %v969, %v1113
        %v1123 = vmul.f32 %v972, %v1113
        %v1124 = vmul.f32 %v974, %v1113
        %v1125 = vmul.f32 %v977, %v1113
        %v1126 = vmul.f32 %v979, %v1113
        %v1127 = vmul.f32 %v982, %v1113
        %v1128 = vmul.f32 %v984, %v1113
        %v1129 = vmul.f32 %v987, %v1113
        %v1130 = vmul.f32 %v989, %v1113
        %v1131 = vmul.f32 %v992, %v1113
        %v1132 = vmul.f32 %v994, %v1113
        %v1133 = vmul.f32 %v997, %v1113
        %v1134 = vmul.f32 %v999, %v1113
        %v1135 = vmul.f32 %v1002, %v1113
        %v1136 = vmul.f32 %v1004, %v1113
        %v1137 = vmul.f32 %v1007, %v1113
        %v1138 = vmul.f32 %v1009, %v1113
        %v1139 = vmul.f32 %v1012, %v1113
        %v1140 = vmul.f32 %v1014, %v1113
        %v1141 = vmul.f32 %v1017, %v1113
        %v1142 = vmul.f32 %v1019, %v1113
        %v1143 = vmul.f32 %v1022, %v1113
        %v1144 = vmul.f32 %v1024, %v1113
        %v1145 = vmul.f32 %v1027, %v1113
        %v1146 = vmul.f32 %v1029, %v1113
        %v1147 = vmul.f32 %v1032, %v1113
        %v1148 = vmul.f32 %v1034, %v1113
        %v1149 = vmul.f32 %v1037, %v1113
        %v1150 = vmul.f32 %v1039, %v1113
        %v1151 = vmul.f32 %v1042, %v1113
        %v1152 = vmul.f32 %v1044, %v1113
        %v1153 = vmul.f32 %v1047, %v1113
        %v1154 = vmul.f32 %v1049, %v1113
        %v1155 = vmul.f32 %v1052, %v1113
        %v1156 = vmul.f32 %v1054, %v1113
        %v1157 = vmul.f32 %v1057, %v1113
        %v1158 = vmul.f32 %v1059, %v1113
        %v1159 = vmul.f32 %v1062, %v1113
        %v1160 = vmul.f32 %v1064, %v1113
        %v1161 = vmul.f32 %v1067, %v1113
        %v1162 = vmul.f32 %v1069, %v1113
        %v1163 = vmul.f32 %v1072, %v1113
        %v1164 = vmul.f32 %v1074, %v1113
        %v1165 = vmul.f32 %v1077, %v1113
        %v1166 = vmul.f32 %v1079, %v1113
        %v1167 = vmul.f32 %v1082, %v1113
        %v1168 = vmul.f32 %v1084, %v1113
        %v1169 = vmul.f32 %v1087, %v1113
        %v1170 = vmul.f32 %v1089, %v1113
        %v1171 = vmul.f32 %v1092, %v1113
        %v1172 = vmul.f32 %v1094, %v1113
        %v1173 = vmul.f32 %v1097, %v1113
        %v1174 = vmul.f32 %v1099, %v1113
        %v1175 = vmul.f32 %v1102, %v1113
        %v1176 = vmul.f32 %v1104, %v1113
        %v1177 = vmul.f32 %v1107, %v1113
        %v1178 = vmul.f32 %v1109, %v1113
        %v1179 = vld [vmem:[%s259] sm:$0x1]
        %v1181 = vperm.slane %v1179, 0
        %v1183 = vadd.f32 %v1115, %v1181
        %v1184 = vadd.f32 %v1116, %v1181
        %v1185 = vadd.f32 %v1117, %v1181
        %v1186 = vadd.f32 %v1118, %v1181
        %v1187 = vadd.f32 %v1119, %v1181
        %v1188 = vadd.f32 %v1120, %v1181
        %v1189 = vadd.f32 %v1121, %v1181
        %v1190 = vadd.f32 %v1122, %v1181
        %v1191 = vadd.f32 %v1123, %v1181
        %v1192 = vadd.f32 %v1124, %v1181
        %v1193 = vadd.f32 %v1125, %v1181
        %v1194 = vadd.f32 %v1126, %v1181
        %v1195 = vadd.f32 %v1127, %v1181
        %v1196 = vadd.f32 %v1128, %v1181
        %v1197 = vadd.f32 %v1129, %v1181
        %v1198 = vadd.f32 %v1130, %v1181
        %v1199 = vadd.f32 %v1131, %v1181
        %v1200 = vadd.f32 %v1132, %v1181
        %v1201 = vadd.f32 %v1133, %v1181
        %v1202 = vadd.f32 %v1134, %v1181
        %v1203 = vadd.f32 %v1135, %v1181
        %v1204 = vadd.f32 %v1136, %v1181
        %v1205 = vadd.f32 %v1137, %v1181
        %v1206 = vadd.f32 %v1138, %v1181
        %v1207 = vadd.f32 %v1139, %v1181
        %v1208 = vadd.f32 %v1140, %v1181
        %v1209 = vadd.f32 %v1141, %v1181
        %v1210 = vadd.f32 %v1142, %v1181
        %v1211 = vadd.f32 %v1143, %v1181
        %v1212 = vadd.f32 %v1144, %v1181
        %v1213 = vadd.f32 %v1145, %v1181
        %v1214 = vadd.f32 %v1146, %v1181
        %v1215 = vadd.f32 %v1147, %v1181
        %v1216 = vadd.f32 %v1148, %v1181
        %v1217 = vadd.f32 %v1149, %v1181
        %v1218 = vadd.f32 %v1150, %v1181
        %v1219 = vadd.f32 %v1151, %v1181
        %v1220 = vadd.f32 %v1152, %v1181
        %v1221 = vadd.f32 %v1153, %v1181
        %v1222 = vadd.f32 %v1154, %v1181
        %v1223 = vadd.f32 %v1155, %v1181
        %v1224 = vadd.f32 %v1156, %v1181
        %v1225 = vadd.f32 %v1157, %v1181
        %v1226 = vadd.f32 %v1158, %v1181
        %v1227 = vadd.f32 %v1159, %v1181
        %v1228 = vadd.f32 %v1160, %v1181
        %v1229 = vadd.f32 %v1161, %v1181
        %v1230 = vadd.f32 %v1162, %v1181
        %v1231 = vadd.f32 %v1163, %v1181
        %v1232 = vadd.f32 %v1164, %v1181
        %v1233 = vadd.f32 %v1165, %v1181
        %v1234 = vadd.f32 %v1166, %v1181
        %v1235 = vadd.f32 %v1167, %v1181
        %v1236 = vadd.f32 %v1168, %v1181
        %v1237 = vadd.f32 %v1169, %v1181
        %v1238 = vadd.f32 %v1170, %v1181
        %v1239 = vadd.f32 %v1171, %v1181
        %v1240 = vadd.f32 %v1172, %v1181
        %v1241 = vadd.f32 %v1173, %v1181
        %v1242 = vadd.f32 %v1174, %v1181
        %v1243 = vadd.f32 %v1175, %v1181
        %v1244 = vadd.f32 %v1176, %v1181
        %v1245 = vadd.f32 %v1177, %v1181
        %v1246 = vadd.f32 %v1178, %v1181
        %v1247 = vmax.f32 %v1183, 0.0
        %v1248 = vmax.f32 %v1184, 0.0
        %v1249 = vmax.f32 %v1185, 0.0
        %v1250 = vmax.f32 %v1186, 0.0
        %v1251 = vmax.f32 %v1187, 0.0
        %v1252 = vmax.f32 %v1188, 0.0
        %v1253 = vmax.f32 %v1189, 0.0
        %v1254 = vmax.f32 %v1190, 0.0
        %v1255 = vmax.f32 %v1191, 0.0
        %v1256 = vmax.f32 %v1192, 0.0
        %v1257 = vmax.f32 %v1193, 0.0
        %v1258 = vmax.f32 %v1194, 0.0
        %v1259 = vmax.f32 %v1195, 0.0
        %v1260 = vmax.f32 %v1196, 0.0
        %v1261 = vmax.f32 %v1197, 0.0
        %v1262 = vmax.f32 %v1198, 0.0
        %v1263 = vmax.f32 %v1199, 0.0
        %v1264 = vmax.f32 %v1200, 0.0
        %v1265 = vmax.f32 %v1201, 0.0
        %v1266 = vmax.f32 %v1202, 0.0
        %v1267 = vmax.f32 %v1203, 0.0
        %v1268 = vmax.f32 %v1204, 0.0
        %v1269 = vmax.f32 %v1205, 0.0
        %v1270 = vmax.f32 %v1206, 0.0
        %v1271 = vmax.f32 %v1207, 0.0
        %v1272 = vmax.f32 %v1208, 0.0
        %v1273 = vmax.f32 %v1209, 0.0
        %v1274 = vmax.f32 %v1210, 0.0
        %v1275 = vmax.f32 %v1211, 0.0
        %v1276 = vmax.f32 %v1212, 0.0
        %v1277 = vmax.f32 %v1213, 0.0
        %v1278 = vmax.f32 %v1214, 0.0
        %v1279 = vmax.f32 %v1215, 0.0
        %v1280 = vmax.f32 %v1216, 0.0
        %v1281 = vmax.f32 %v1217, 0.0
        %v1282 = vmax.f32 %v1218, 0.0
        %v1283 = vmax.f32 %v1219, 0.0
        %v1284 = vmax.f32 %v1220, 0.0
        %v1285 = vmax.f32 %v1221, 0.0
        %v1286 = vmax.f32 %v1222, 0.0
        %v1287 = vmax.f32 %v1223, 0.0
        %v1288 = vmax.f32 %v1224, 0.0
        %v1289 = vmax.f32 %v1225, 0.0
        %v1290 = vmax.f32 %v1226, 0.0
        %v1291 = vmax.f32 %v1227, 0.0
        %v1292 = vmax.f32 %v1228, 0.0
        %v1293 = vmax.f32 %v1229, 0.0
        %v1294 = vmax.f32 %v1230, 0.0
        %v1295 = vmax.f32 %v1231, 0.0
        %v1296 = vmax.f32 %v1232, 0.0
        %v1297 = vmax.f32 %v1233, 0.0
        %v1298 = vmax.f32 %v1234, 0.0
        %v1299 = vmax.f32 %v1235, 0.0
        %v1300 = vmax.f32 %v1236, 0.0
        %v1301 = vmax.f32 %v1237, 0.0
        %v1302 = vmax.f32 %v1238, 0.0
        %v1303 = vmax.f32 %v1239, 0.0
        %v1304 = vmax.f32 %v1240, 0.0
        %v1305 = vmax.f32 %v1241, 0.0
        %v1306 = vmax.f32 %v1242, 0.0
        %v1307 = vmax.f32 %v1243, 0.0
        %v1308 = vmax.f32 %v1244, 0.0
        %v1309 = vmax.f32 %v1245, 0.0
        %v1310 = vmax.f32 %v1246, 0.0
        %v1311 = vpack.c.bf16 %v1247, %v1247
        %v1312 = vpack.c.bf16 %v1248, %v1248
        %v1313 = vpack.c.bf16 %v1249, %v1249
        %v1314 = vpack.c.bf16 %v1250, %v1250
        %v1315 = vpack.c.bf16 %v1251, %v1251
        %v1316 = vpack.c.bf16 %v1252, %v1252
        %v1317 = vpack.c.bf16 %v1253, %v1253
        %v1318 = vpack.c.bf16 %v1254, %v1254
        %v1319 = vpack.c.bf16 %v1255, %v1255
        %v1320 = vpack.c.bf16 %v1256, %v1256
        %v1321 = vpack.c.bf16 %v1257, %v1257
        %v1322 = vpack.c.bf16 %v1258, %v1258
        %v1323 = vpack.c.bf16 %v1259, %v1259
        %v1324 = vpack.c.bf16 %v1260, %v1260
        %v1325 = vpack.c.bf16 %v1261, %v1261
        %v1326 = vpack.c.bf16 %v1262, %v1262
        %v1327 = vpack.c.bf16 %v1263, %v1263
        %v1328 = vpack.c.bf16 %v1264, %v1264
        %v1329 = vpack.c.bf16 %v1265, %v1265
        %v1330 = vpack.c.bf16 %v1266, %v1266
        %v1331 = vpack.c.bf16 %v1267, %v1267
        %v1332 = vpack.c.bf16 %v1268, %v1268
        %v1333 = vpack.c.bf16 %v1269, %v1269
        %v1334 = vpack.c.bf16 %v1270, %v1270
        %v1335 = vpack.c.bf16 %v1271, %v1271
        %v1336 = vpack.c.bf16 %v1272, %v1272
        %v1337 = vpack.c.bf16 %v1273, %v1273
        %v1338 = vpack.c.bf16 %v1274, %v1274
        %v1339 = vpack.c.bf16 %v1275, %v1275
        %v1340 = vpack.c.bf16 %v1276, %v1276
        %v1341 = vpack.c.bf16 %v1277, %v1277
        %v1342 = vpack.c.bf16 %v1278, %v1278
        %v1343 = vpack.c.bf16 %v1279, %v1279
        %v1344 = vpack.c.bf16 %v1280, %v1280
        %v1345 = vpack.c.bf16 %v1281, %v1281
        %v1346 = vpack.c.bf16 %v1282, %v1282
        %v1347 = vpack.c.bf16 %v1283, %v1283
        %v1348 = vpack.c.bf16 %v1284, %v1284
        %v1349 = vpack.c.bf16 %v1285, %v1285
        %v1350 = vpack.c.bf16 %v1286, %v1286
        %v1351 = vpack.c.bf16 %v1287, %v1287
        %v1352 = vpack.c.bf16 %v1288, %v1288
        %v1353 = vpack.c.bf16 %v1289, %v1289
        %v1354 = vpack.c.bf16 %v1290, %v1290
        %v1355 = vpack.c.bf16 %v1291, %v1291
        %v1356 = vpack.c.bf16 %v1292, %v1292
        %v1357 = vpack.c.bf16 %v1293, %v1293
        %v1358 = vpack.c.bf16 %v1294, %v1294
        %v1359 = vpack.c.bf16 %v1295, %v1295
        %v1360 = vpack.c.bf16 %v1296, %v1296
        %v1361 = vpack.c.bf16 %v1297, %v1297
        %v1362 = vpack.c.bf16 %v1298, %v1298
        %v1363 = vpack.c.bf16 %v1299, %v1299
        %v1364 = vpack.c.bf16 %v1300, %v1300
        %v1365 = vpack.c.bf16 %v1301, %v1301
        %v1366 = vpack.c.bf16 %v1302, %v1302
        %v1367 = vpack.c.bf16 %v1303, %v1303
        %v1368 = vpack.c.bf16 %v1304, %v1304
        %v1369 = vpack.c.bf16 %v1305, %v1305
        %v1370 = vpack.c.bf16 %v1306, %v1306
        %v1371 = vpack.c.bf16 %v1307, %v1307
        %v1372 = vpack.c.bf16 %v1308, %v1308
        %v1373 = vpack.c.bf16 %v1309, %v1309
        %v1374 = vpack.c.bf16 %v1310, %v1310
        %vm1375 = vcmask 519168
        %1376 = vst.msk [vmem:[%s242] sm:$0xf] %vm1375, %v1311
        %1377 = vst.msk [vmem:[%s242 + $0x4] sm:$0xf] %vm1375, %v1312
        %1378 = vst.msk [vmem:[%s242 + $0x8] sm:$0xf] %vm1375, %v1313
        %1379 = vst.msk [vmem:[%s242 + $0xc] sm:$0xf] %vm1375, %v1314
        %1380 = vst.msk [vmem:[%s242 + $0x10] sm:$0xf] %vm1375, %v1315
        %1381 = vst.msk [vmem:[%s242 + $0x14] sm:$0xf] %vm1375, %v1316
        %1382 = vst.msk [vmem:[%s242 + $0x18] sm:$0xf] %vm1375, %v1317
        %1383 = vst.msk [vmem:[%s242 + $0x1c] sm:$0xf] %vm1375, %v1318
        %1384 = vst.msk [vmem:[%s242 + $0x20] sm:$0xf] %vm1375, %v1319
        %1385 = vst.msk [vmem:[%s242 + $0x24] sm:$0xf] %vm1375, %v1320
        %1386 = vst.msk [vmem:[%s242 + $0x28] sm:$0xf] %vm1375, %v1321
        %1387 = vst.msk [vmem:[%s242 + $0x2c] sm:$0xf] %vm1375, %v1322
        %1388 = vst.msk [vmem:[%s242 + $0x30] sm:$0xf] %vm1375, %v1323
        %1389 = vst.msk [vmem:[%s242 + $0x34] sm:$0xf] %vm1375, %v1324
        %1390 = vst.msk [vmem:[%s242 + $0x38] sm:$0xf] %vm1375, %v1325
        %1391 = vst.msk [vmem:[%s242 + $0x3c] sm:$0xf] %vm1375, %v1326
        %1392 = vst.msk [vmem:[%s242 + $0x40] sm:$0xf] %vm1375, %v1327
        %1393 = vst.msk [vmem:[%s242 + $0x44] sm:$0xf] %vm1375, %v1328
        %1394 = vst.msk [vmem:[%s242 + $0x48] sm:$0xf] %vm1375, %v1329
        %1395 = vst.msk [vmem:[%s242 + $0x4c] sm:$0xf] %vm1375, %v1330
        %1396 = vst.msk [vmem:[%s242 + $0x50] sm:$0xf] %vm1375, %v1331
        %1397 = vst.msk [vmem:[%s242 + $0x54] sm:$0xf] %vm1375, %v1332
        %1398 = vst.msk [vmem:[%s242 + $0x58] sm:$0xf] %vm1375, %v1333
        %1399 = vst.msk [vmem:[%s242 + $0x5c] sm:$0xf] %vm1375, %v1334
        %1400 = vst.msk [vmem:[%s242 + $0x60] sm:$0xf] %vm1375, %v1335
        %1401 = vst.msk [vmem:[%s242 + $0x64] sm:$0xf] %vm1375, %v1336
        %1402 = vst.msk [vmem:[%s242 + $0x68] sm:$0xf] %vm1375, %v1337
        %1403 = vst.msk [vmem:[%s242 + $0x6c] sm:$0xf] %vm1375, %v1338
        %1404 = vst.msk [vmem:[%s242 + $0x70] sm:$0xf] %vm1375, %v1339
        %1405 = vst.msk [vmem:[%s242 + $0x74] sm:$0xf] %vm1375, %v1340
        %1406 = vst.msk [vmem:[%s242 + $0x78] sm:$0xf] %vm1375, %v1341
        %1407 = vst.msk [vmem:[%s242 + $0x7c] sm:$0xf] %vm1375, %v1342
        %1408 = vst.msk [vmem:[%s242 + $0x80] sm:$0xf] %vm1375, %v1343
        %1409 = vst.msk [vmem:[%s242 + $0x84] sm:$0xf] %vm1375, %v1344
        %1410 = vst.msk [vmem:[%s242 + $0x88] sm:$0xf] %vm1375, %v1345
        %1411 = vst.msk [vmem:[%s242 + $0x8c] sm:$0xf] %vm1375, %v1346
        %1412 = vst.msk [vmem:[%s242 + $0x90] sm:$0xf] %vm1375, %v1347
        %1413 = vst.msk [vmem:[%s242 + $0x94] sm:$0xf] %vm1375, %v1348
        %1414 = vst.msk [vmem:[%s242 + $0x98] sm:$0xf] %vm1375, %v1349
        %1415 = vst.msk [vmem:[%s242 + $0x9c] sm:$0xf] %vm1375, %v1350
        %1416 = vst.msk [vmem:[%s242 + $0xa0] sm:$0xf] %vm1375, %v1351
        %1417 = vst.msk [vmem:[%s242 + $0xa4] sm:$0xf] %vm1375, %v1352
        %1418 = vst.msk [vmem:[%s242 + $0xa8] sm:$0xf] %vm1375, %v1353
        %1419 = vst.msk [vmem:[%s242 + $0xac] sm:$0xf] %vm1375, %v1354
        %1420 = vst.msk [vmem:[%s242 + $0xb0] sm:$0xf] %vm1375, %v1355
        %1421 = vst.msk [vmem:[%s242 + $0xb4] sm:$0xf] %vm1375, %v1356
        %1422 = vst.msk [vmem:[%s242 + $0xb8] sm:$0xf] %vm1375, %v1357
        %1423 = vst.msk [vmem:[%s242 + $0xbc] sm:$0xf] %vm1375, %v1358
        %1424 = vst.msk [vmem:[%s242 + $0xc0] sm:$0xf] %vm1375, %v1359
        %1425 = vst.msk [vmem:[%s242 + $0xc4] sm:$0xf] %vm1375, %v1360
        %1426 = vst.msk [vmem:[%s242 + $0xc8] sm:$0xf] %vm1375, %v1361
        %1427 = vst.msk [vmem:[%s242 + $0xcc] sm:$0xf] %vm1375, %v1362
        %1428 = vst.msk [vmem:[%s242 + $0xd0] sm:$0xf] %vm1375, %v1363
        %1429 = vst.msk [vmem:[%s242 + $0xd4] sm:$0xf] %vm1375, %v1364
        %1430 = vst.msk [vmem:[%s242 + $0xd8] sm:$0xf] %vm1375, %v1365
        %1431 = vst.msk [vmem:[%s242 + $0xdc] sm:$0xf] %vm1375, %v1366
        %1432 = vst.msk [vmem:[%s242 + $0xe0] sm:$0xf] %vm1375, %v1367
        %1433 = vst.msk [vmem:[%s242 + $0xe4] sm:$0xf] %vm1375, %v1368
        %1434 = vst.msk [vmem:[%s242 + $0xe8] sm:$0xf] %vm1375, %v1369
        %1435 = vst.msk [vmem:[%s242 + $0xec] sm:$0xf] %vm1375, %v1370
        %1436 = vst.msk [vmem:[%s242 + $0xf0] sm:$0xf] %vm1375, %v1371
        %1437 = vst.msk [vmem:[%s242 + $0xf4] sm:$0xf] %vm1375, %v1372
        %1438 = vst.msk [vmem:[%s242 + $0xf8] sm:$0xf] %vm1375, %v1373
        %1439 = vst.msk [vmem:[%s242 + $0xfc] sm:$0xf] %vm1375, %v1374
        %s1440 = sand.u32 %s144, 1
        %s1441 = scalar_lea.sflag [#allocation3], %s1440
        %s1442 = sand.u32 %s144, 1
        %s1443 = smul.addr %s1442, 256
        %s1444 = scalar_lea.vmem [#allocation2], %s1443
        // Predicated region
        $region37: #{conv_bn.1} parent=35 // pred_check
          %p1445 = pneg %p154
        $region38: #{conv_bn.1} parent=35 // pred_check_branch
          %1447 = sbr.rel (%p1445) target = $region40
        $region39: #{conv_bn.1} parent=35 // pred_region
          %s1448 = smul.u32 64, %s22
          %1450 = vsyncadd %s1441, 0
          %s1451 = sadd.s32 %s23, %s1448
          %s1452 = smul.addr %s1451, 4
          %s1453 = scalar_lea.hbm %s4, %s1452
          %s1454 = sshll.u32 %s1444, 4
          %s1455 = int_to_ptr.vmem [resolvable:$true] %s1454
          %s1456 = sshll.u32 %s1453, 4
          %s1457 = int_to_ptr.hbm [resolvable:$true] %s1456
          %1462 = dma.vmem_to_hbm [thread:$0]  %s1455, 4096, %s1457, %s1441, 64, 64, 4
        $region40: #{conv_bn.1} parent=35 // pred_fallthru
          _
      $region36: #{conv_bn.1} parent=5 // pred_fallthru
        _
      %p1463 = scmp.le.s32.totalorder 2, %s13
      // Predicated region
      $region41: #{conv_bn.1} parent=5 // pred_check
        %p1464 = pneg %p1463
      $region42: #{conv_bn.1} parent=5 // pred_check_branch
        %1466 = sbr.rel (%p1464) target = $region44
      $region43: #{conv_bn.1} parent=5 // pred_region
        %s1467 = ssub.s32 %s13, 2
        // Predicated region
        $region45: #{conv_bn.1} parent=43 // pred_check
          %p1468 = pneg %p160
        $region46: #{conv_bn.1} parent=43 // pred_check_branch
          %1470 = sbr.rel (%p1468) target = $region48
        $region47: #{conv_bn.1} parent=43 // pred_region
          %s1471 = sand.u32 %s145, 1
          %s1472 = scalar_lea.sflag [#allocation3], %s1471
          %s1473 = sand.u32 %s145, 1
          %s1474 = smul.addr %s1473, 256
          %s1475 = scalar_lea.vmem [#allocation2], %s1474
          %1477 = dma.done %s1472, 4096
        $region48: #{conv_bn.1} parent=43 // pred_fallthru
          _
      $region44: #{conv_bn.1} parent=5 // pred_fallthru
        _
    $region6: #{conv_bn.1} parent=1 // loop_footer
      %s17 = sadd.s32 1, %s13
    $region7: #{conv_bn.1} parent=1 // loop_footer_branch
      %12 = sbr.rel target = $region3
    $region8: #{conv_bn.1} parent=1 // loop_exit
      _
    %1478 = vsyncpa [#allocation3], 1
    %s1479 = scalar_lea.sflag [#allocation3], 1
    %1480 = vsyncpa %s1479, 1

</llo_original>
